<compile_context>
chip_gen: v6e
topology: v6e:2x2x1
jax: 0.10.0
libtpu: 0.0.40
codegen_flags: <defaults>
</compile_context>

<pallas_src>
import functools

import jax
import jax.numpy as jnp
from jax.experimental import pallas as pl
from jax.experimental.pallas import tpu as pltpu


def _round_up(x, m):
    return ((x + m - 1) // m) * m


def _rnnlm_kernel(tok_ref, emb_ref, wih_ref, whh_ref, b_ref, waff_ref,
                  baff_ref, out_ref, hs_ref, *, S, B_P, H_P):
    """Grid axis j sweeps lane-aligned column blocks of the affine head.

    Padded, lane-aligned shapes seen by the kernel:
      tok_ref : (S*B_P, 1) int32, time-major (row = t*B_P + b)
      emb_ref : (V_P, D_P)        zero-padded embedding table
      wih_ref : (D_P, H_P)        W_ih^T
      whh_ref : (H_P, H_P)        W_hh^T
      b_ref   : (1, H_P)          b_ih + b_hh (fused)
      waff_ref: (1, S*H_P, BN)    block-major W_aff^T tile (one contiguous DMA)
      baff_ref: (1, BN)
      out_ref : (B_P, BN)
      hs_ref  : (B_P, S*H_P) f32 VMEM scratch, persists across grid steps
    """
    # ---- Embedding + input projection + serial recurrence: computed ONCE. ----
    @pl.when(pl.program_id(0) == 0)
    def _():
        toks = tok_ref[...]                                        # (S*B_P, 1)
        V_P = emb_ref.shape[0]
        iota = jax.lax.broadcasted_iota(jnp.int32, (S * B_P, V_P), 1)
        onehot = (iota == toks).astype(jnp.float32)                # (S*B_P, V_P)
        # TODO(synk): for large vocab, replace the one-hot MXU lookup with
        # scalar-prefetched tokens + per-row DMA gather from an HBM table.
        embs = jnp.dot(onehot, emb_ref[...],
                       preferred_element_type=jnp.float32)         # (S*B_P, D_P)

        # Hoisted input projection: one matmul for all timesteps + fused bias.
        xw = jnp.dot(embs, wih_ref[...],
                     preferred_element_type=jnp.float32) + b_ref[...]

        # Pin W_hh^T in vregs only when it is a single lane block; otherwise
        # let Mosaic schedule the loads each step (vreg-pressure guard).
        whh = whh_ref[...] if H_P == 128 else None

        # S is small and static here -> static unroll keeps full scheduler
        # visibility; for large S switch to lax.fori_loop over a VMEM xw slab.
        h = jnp.zeros((B_P, H_P), jnp.float32)
        for t in range(S):
            rhs = whh if whh is not None else whh_ref[...]
            h = jnp.tanh(xw[t * B_P:(t + 1) * B_P, :]
                         + jnp.dot(h, rhs, preferred_element_type=jnp.float32))
            hs_ref[:, t * H_P:(t + 1) * H_P] = h                   # padded lanes stay 0

    # ---- Affine head: one long-K GEMM per output-column block. ----
    out_ref[...] = (jnp.dot(hs_ref[...], waff_ref[0],
                            preferred_element_type=jnp.float32)
                    + baff_ref[...])


def rnnlm_forward(tokens, params, *, block_n=1024, head_dtype=jnp.float32):
    B, S = tokens.shape
    V, D = params["emb"].shape
    H = params["w_hh"].shape[0]
    SV = S * V

    B_P = _round_up(B, 8)            # full 8-sublane vregs, unmasked stores
    V_P = _round_up(V, 128)
    D_P = _round_up(D, 128)
    H_P = _round_up(H, 128)
    N_lane = _round_up(SV, 128)
    bn = min(_round_up(block_n, 128), N_lane)   # collapses to one step when small
    N_P = _round_up(N_lane, bn)
    n_blocks = N_P // bn

    f32 = jnp.float32
    # Zero padding keeps padded D/H lanes exactly 0 through tanh and the head.
    emb_p = jnp.pad(params["emb"].astype(f32), ((0, V_P - V), (0, D_P - D)))
    wih_t = jnp.pad(params["w_ih"].T.astype(f32), ((0, D_P - D), (0, H_P - H)))
    whh_t = jnp.pad(params["w_hh"].T.astype(f32), ((0, H_P - H), (0, H_P - H)))
    b_rnn = jnp.pad((params["b_ih"] + params["b_hh"]).astype(f32).reshape(1, H),
                    ((0, 0), (0, H_P - H)))

    # W_aff^T -> (S*H_P, N_P) matching hs.reshape(B, S*H_P) feature order, then
    # block-major (n_blocks, S*H_P, bn) so every grid tile is ONE contiguous DMA.
    waff_t = jnp.pad(params["w_aff"].T.astype(f32).reshape(S, H, SV),
                     ((0, 0), (0, H_P - H), (0, N_P - SV)))
    waff_t = waff_t.reshape(S * H_P, N_P)
    waff_bm = (waff_t.reshape(S * H_P, n_blocks, bn)
               .transpose(1, 0, 2).astype(head_dtype))
    baff = jnp.pad(params["b_aff"].astype(f32).reshape(1, SV),
                   ((0, 0), (0, N_P - SV)))

    # Time-major tokens, batch padded to 8 (pad rows use token 0, discarded).
    toks_p = jnp.pad(tokens.astype(jnp.int32), ((0, B_P - B), (0, 0)))
    toks_tm = toks_p.T.reshape(S * B_P, 1)

    kernel = functools.partial(_rnnlm_kernel, S=S, B_P=B_P, H_P=H_P)

    out = pl.pallas_call(
        kernel,
        out_shape=jax.ShapeDtypeStruct((B_P, N_P), jnp.float32),
        grid_spec=pltpu.PrefetchScalarGridSpec(
            num_scalar_prefetch=0,
            grid=(n_blocks,),
            in_specs=[
                pl.BlockSpec((S * B_P, 1), lambda j: (0, 0)),
                pl.BlockSpec((V_P, D_P), lambda j: (0, 0)),
                pl.BlockSpec((D_P, H_P), lambda j: (0, 0)),
                pl.BlockSpec((H_P, H_P), lambda j: (0, 0)),
                pl.BlockSpec((1, H_P), lambda j: (0, 0)),
                pl.BlockSpec((1, S * H_P, bn), lambda j: (j, 0, 0)),  # contiguous
                pl.BlockSpec((1, bn), lambda j: (0, j)),
            ],
            out_specs=pl.BlockSpec((B_P, bn), lambda j: (0, j)),
            scratch_shapes=[pltpu.VMEM((B_P, S * H_P), jnp.float32)],  # hs
        ),
        compiler_params=pltpu.CompilerParams(
            # Compute-once gating on program_id(0)==0 needs sequential order.
            dimension_semantics=("arbitrary",),
            # <= 48 MiB: safe on v5e/v6e (128 MiB phys) and v7x (64 MiB phys).
            vmem_limit_bytes=48 * 1024 * 1024,
        ),
    )(toks_tm, emb_p, wih_t, whh_t, b_rnn, waff_bm, baff)

    return out[:B, :SV].reshape(B, S, V)


def rnnlm_reference(tokens, params):
    """Pure-JAX reference matching the PyTorch forward semantics."""
    B, S = tokens.shape
    V, D = params["emb"].shape
    H = params["w_hh"].shape[0]
    embs = params["emb"][tokens]                                # (B, S, D)
    h = jnp.zeros((B, H), jnp.float32)
    hs = []
    for t in range(S):
        h = jnp.tanh(embs[:, t, :] @ params["w_ih"].T + params["b_ih"]
                     + h @ params["w_hh"].T + params["b_hh"])
        hs.append(h)
    hs = jnp.stack(hs, axis=1)                                  # (B, S, H)
    ys = hs.reshape(B, S * H) @ params["w_aff"].T + params["b_aff"]
    return ys.reshape(B, S, V)


def init_params(key, vocab_size, seq_len, x_dim=10, hidden=10):
    ks = jax.random.split(key, 7)
    s_rnn = 1.0 / jnp.sqrt(hidden)
    s_aff = 1.0 / jnp.sqrt(seq_len * x_dim)
    return {
        "emb":   jax.random.normal(ks[0], (vocab_size, x_dim), jnp.float32),
        "w_ih":  jax.random.uniform(ks[1], (hidden, x_dim), jnp.float32, -s_rnn, s_rnn),
        "w_hh":  jax.random.uniform(ks[2], (hidden, hidden), jnp.float32, -s_rnn, s_rnn),
        "b_ih":  jax.random.uniform(ks[3], (hidden,), jnp.float32, -s_rnn, s_rnn),
        "b_hh":  jax.random.uniform(ks[4], (hidden,), jnp.float32, -s_rnn, s_rnn),
        "w_aff": jax.random.uniform(ks[5], (seq_len * vocab_size, seq_len * x_dim),
                                    jnp.float32, -s_aff, s_aff),
        "b_aff": jax.random.uniform(ks[6], (seq_len * vocab_size,), jnp.float32,
                                    -s_aff, s_aff),
    }


if __name__ == "__main__":
    vocab_size = 16
    seq_len = 10
    batch = 2

    key = jax.random.PRNGKey(0)
    k_par, k_tok = jax.random.split(key)
    params = init_params(k_par, vocab_size, seq_len)
    tokens = jax.random.randint(k_tok, (batch, seq_len), 0, vocab_size, jnp.int32)

    ys_ref = rnnlm_reference(tokens, params)

    # f32 head weights: tight tolerance against the pure-JAX reference.
    ys = jax.block_until_ready(rnnlm_forward(tokens, params))
    assert ys.shape == (batch, seq_len, vocab_size)
    assert jnp.allclose(ys, ys_ref, atol=1e-4, rtol=1e-4), "f32 mismatch vs reference"

    # bf16-streamed head weights (the at-scale configuration): relaxed tolerance.
    ys_bf16 = jax.block_until_ready(
        rnnlm_forward(tokens, params, head_dtype=jnp.bfloat16))
    assert jnp.allclose(ys_bf16, ys_ref, atol=5e-2, rtol=5e-2), "bf16 mismatch vs reference"

    print("KERNEL_OK")
</pallas_src>

<mosaic_0001>
module attributes {stable_mosaic.version = 11 : i64} {
  func.func @_rnnlm_kernel(%arg0: i32, %arg1: memref<80x1xi32, #tpu.memory_space<vmem>>, %arg2: memref<128x128xf32, #tpu.memory_space<vmem>>, %arg3: memref<128x128xf32, #tpu.memory_space<vmem>>, %arg4: memref<128x128xf32, #tpu.memory_space<vmem>>, %arg5: memref<1x128xf32, #tpu.memory_space<vmem>>, %arg6: memref<1x1280x256xf32, #tpu.memory_space<vmem>>, %arg7: memref<1x256xf32, #tpu.memory_space<vmem>>, %arg8: memref<8x256xf32, #tpu.memory_space<vmem>>, %arg9: memref<8x1280xf32, #tpu.memory_space<vmem>>) attributes {dimension_semantics = [#tpu.dimension_semantics<arbitrary>], iteration_bounds = array<i64: 1>, scalar_prefetch = 0 : i64, scratch_operands = 1 : i64, tpu.core_type = #tpu.core_type<tc>, window_params = [{pipeline_mode = #tpu.pipeline_mode<synchronous>, transform_indices = @transform_0, window_bounds = array<i64: 80, 1>}, {pipeline_mode = #tpu.pipeline_mode<synchronous>, transform_indices = @transform_1, window_bounds = array<i64: 128, 128>}, {pipeline_mode = #tpu.pipeline_mode<synchronous>, transform_indices = @transform_2, window_bounds = array<i64: 128, 128>}, {pipeline_mode = #tpu.pipeline_mode<synchronous>, transform_indices = @transform_3, window_bounds = array<i64: 128, 128>}, {pipeline_mode = #tpu.pipeline_mode<synchronous>, transform_indices = @transform_4, window_bounds = array<i64: 1, 128>}, {transform_indices = @transform_5, window_bounds = array<i64: 1, 1280, 256>}, {transform_indices = @transform_6, window_bounds = array<i64: 1, 256>}, {transform_indices = @transform_7, window_bounds = array<i64: 8, 256>}]} {
    %c0_i32 = arith.constant 0 : i32
    %0 = arith.cmpi eq, %arg0, %c0_i32 : i32
    %1 = arith.extui %0 : i1 to i32
    %c0_i32_0 = arith.constant 0 : i32
    %2 = arith.cmpi ne, %1, %c0_i32_0 : i32
    scf.if %2 {
      %c0_9 = arith.constant 0 : index
      %c0_10 = arith.constant 0 : index
      %11 = vector.load %arg1[%c0_9, %c0_10] : memref<80x1xi32, #tpu.memory_space<vmem>>, vector<80x1xi32>
      %12 = tpu.iota {dimensions = array<i32: 1>} : vector<80x128xi32>
      %13 = vector.broadcast %11 : vector<80x1xi32> to vector<80x128xi32>
      %14 = arith.cmpi eq, %12, %13 : vector<80x128xi32>
      %15 = arith.extui %14 : vector<80x128xi1> to vector<80x128xi32>
      %16 = arith.sitofp %15 : vector<80x128xi32> to vector<80x128xf32>
      %c0_11 = arith.constant 0 : index
      %c0_12 = arith.constant 0 : index
      %17 = vector.load %arg2[%c0_11, %c0_12] : memref<128x128xf32, #tpu.memory_space<vmem>>, vector<128x128xf32>
      %cst_13 = arith.constant dense<0.000000e+00> : vector<80x128xf32>
      %18 = tpu.matmul %16, %17, %cst_13 {dimension_numbers = #tpu.dot_dimension_numbers<[1], [0], [0], [1], [0, 0, 1, 1], [], []>} : vector<80x128xf32>, vector<128x128xf32>, vector<80x128xf32> -> vector<80x128xf32>
      %c0_14 = arith.constant 0 : index
      %c0_15 = arith.constant 0 : index
      %19 = vector.load %arg3[%c0_14, %c0_15] : memref<128x128xf32, #tpu.memory_space<vmem>>, vector<128x128xf32>
      %cst_16 = arith.constant dense<0.000000e+00> : vector<80x128xf32>
      %20 = tpu.matmul %18, %19, %cst_16 {dimension_numbers = #tpu.dot_dimension_numbers<[1], [0], [0], [1], [0, 0, 1, 1], [], []>} : vector<80x128xf32>, vector<128x128xf32>, vector<80x128xf32> -> vector<80x128xf32>
      %c0_17 = arith.constant 0 : index
      %c0_18 = arith.constant 0 : index
      %21 = vector.load %arg5[%c0_17, %c0_18] : memref<1x128xf32, #tpu.memory_space<vmem>>, vector<1x128xf32>
      %22 = vector.broadcast %21 : vector<1x128xf32> to vector<80x128xf32>
      %23 = arith.addf %20, %22 : vector<80x128xf32>
      %c0_19 = arith.constant 0 : index
      %c0_20 = arith.constant 0 : index
      %24 = vector.load %arg4[%c0_19, %c0_20] : memref<128x128xf32, #tpu.memory_space<vmem>>, vector<128x128xf32>
      %cst_21 = arith.constant 0.000000e+00 : f32
      %25 = vector.broadcast %cst_21 : f32 to vector<8x128xf32>
      %26 = vector.extract_strided_slice %23 {offsets = [0, 0], sizes = [8, 128], strides = [1, 1]} : vector<80x128xf32> to vector<8x128xf32>
      %cst_22 = arith.constant dense<0.000000e+00> : vector<8x128xf32>
      %27 = tpu.matmul %25, %24, %cst_22 {dimension_numbers = #tpu.dot_dimension_numbers<[1], [0], [0], [1], [0, 0, 1, 1], [], []>} : vector<8x128xf32>, vector<128x128xf32>, vector<8x128xf32> -> vector<8x128xf32>
      %28 = arith.addf %26, %27 : vector<8x128xf32>
      %29 = math.tanh %28 : vector<8x128xf32>
      %c0_23 = arith.constant 0 : index
      %c0_24 = arith.constant 0 : index
      %30 = vector.load %arg9[%c0_23, %c0_24] : memref<8x1280xf32, #tpu.memory_space<vmem>>, vector<8x128xf32>
      tpu.vector_store %arg9[%c0_23, %c0_24], %29 {strides = array<i32>} : memref<8x1280xf32, #tpu.memory_space<vmem>>, vector<8x128xf32>,
      %31 = vector.extract_strided_slice %23 {offsets = [8, 0], sizes = [8, 128], strides = [1, 1]} : vector<80x128xf32> to vector<8x128xf32>
      %cst_25 = arith.constant dense<0.000000e+00> : vector<8x128xf32>
      %32 = tpu.matmul %29, %24, %cst_25 {dimension_numbers = #tpu.dot_dimension_numbers<[1], [0], [0], [1], [0, 0, 1, 1], [], []>} : vector<8x128xf32>, vector<128x128xf32>, vector<8x128xf32> -> vector<8x128xf32>
      %33 = arith.addf %31, %32 : vector<8x128xf32>
      %34 = math.tanh %33 : vector<8x128xf32>
      %c0_26 = arith.constant 0 : index
      %c128 = arith.constant 128 : index
      %35 = vector.load %arg9[%c0_26, %c128] : memref<8x1280xf32, #tpu.memory_space<vmem>>, vector<8x128xf32>
      tpu.vector_store %arg9[%c0_26, %c128], %34 {strides = array<i32>} : memref<8x1280xf32, #tpu.memory_space<vmem>>, vector<8x128xf32>,
      %36 = vector.extract_strided_slice %23 {offsets = [16, 0], sizes = [8, 128], strides = [1, 1]} : vector<80x128xf32> to vector<8x128xf32>
      %cst_27 = arith.constant dense<0.000000e+00> : vector<8x128xf32>
      %37 = tpu.matmul %34, %24, %cst_27 {dimension_numbers = #tpu.dot_dimension_numbers<[1], [0], [0], [1], [0, 0, 1, 1], [], []>} : vector<8x128xf32>, vector<128x128xf32>, vector<8x128xf32> -> vector<8x128xf32>
      %38 = arith.addf %36, %37 : vector<8x128xf32>
      %39 = math.tanh %38 : vector<8x128xf32>
      %c0_28 = arith.constant 0 : index
      %c256 = arith.constant 256 : index
      %40 = vector.load %arg9[%c0_28, %c256] : memref<8x1280xf32, #tpu.memory_space<vmem>>, vector<8x128xf32>
      tpu.vector_store %arg9[%c0_28, %c256], %39 {strides = array<i32>} : memref<8x1280xf32, #tpu.memory_space<vmem>>, vector<8x128xf32>,
      %41 = vector.extract_strided_slice %23 {offsets = [24, 0], sizes = [8, 128], strides = [1, 1]} : vector<80x128xf32> to vector<8x128xf32>
      %cst_29 = arith.constant dense<0.000000e+00> : vector<8x128xf32>
      %42 = tpu.matmul %39, %24, %cst_29 {dimension_numbers = #tpu.dot_dimension_numbers<[1], [0], [0], [1], [0, 0, 1, 1], [], []>} : vector<8x128xf32>, vector<128x128xf32>, vector<8x128xf32> -> vector<8x128xf32>
      %43 = arith.addf %41, %42 : vector<8x128xf32>
      %44 = math.tanh %43 : vector<8x128xf32>
      %c0_30 = arith.constant 0 : index
      %c384 = arith.constant 384 : index
      %45 = vector.load %arg9[%c0_30, %c384] : memref<8x1280xf32, #tpu.memory_space<vmem>>, vector<8x128xf32>
      tpu.vector_store %arg9[%c0_30, %c384], %44 {strides = array<i32>} : memref<8x1280xf32, #tpu.memory_space<vmem>>, vector<8x128xf32>,
      %46 = vector.extract_strided_slice %23 {offsets = [32, 0], sizes = [8, 128], strides = [1, 1]} : vector<80x128xf32> to vector<8x128xf32>
      %cst_31 = arith.constant dense<0.000000e+00> : vector<8x128xf32>
      %47 = tpu.matmul %44, %24, %cst_31 {dimension_numbers = #tpu.dot_dimension_numbers<[1], [0], [0], [1], [0, 0, 1, 1], [], []>} : vector<8x128xf32>, vector<128x128xf32>, vector<8x128xf32> -> vector<8x128xf32>
      %48 = arith.addf %46, %47 : vector<8x128xf32>
      %49 = math.tanh %48 : vector<8x128xf32>
      %c0_32 = arith.constant 0 : index
      %c512 = arith.constant 512 : index
      %50 = vector.load %arg9[%c0_32, %c512] : memref<8x1280xf32, #tpu.memory_space<vmem>>, vector<8x128xf32>
      tpu.vector_store %arg9[%c0_32, %c512], %49 {strides = array<i32>} : memref<8x1280xf32, #tpu.memory_space<vmem>>, vector<8x128xf32>,
      %51 = vector.extract_strided_slice %23 {offsets = [40, 0], sizes = [8, 128], strides = [1, 1]} : vector<80x128xf32> to vector<8x128xf32>
      %cst_33 = arith.constant dense<0.000000e+00> : vector<8x128xf32>
      %52 = tpu.matmul %49, %24, %cst_33 {dimension_numbers = #tpu.dot_dimension_numbers<[1], [0], [0], [1], [0, 0, 1, 1], [], []>} : vector<8x128xf32>, vector<128x128xf32>, vector<8x128xf32> -> vector<8x128xf32>
      %53 = arith.addf %51, %52 : vector<8x128xf32>
      %54 = math.tanh %53 : vector<8x128xf32>
      %c0_34 = arith.constant 0 : index
      %c640 = arith.constant 640 : index
      %55 = vector.load %arg9[%c0_34, %c640] : memref<8x1280xf32, #tpu.memory_space<vmem>>, vector<8x128xf32>
      tpu.vector_store %arg9[%c0_34, %c640], %54 {strides = array<i32>} : memref<8x1280xf32, #tpu.memory_space<vmem>>, vector<8x128xf32>,
      %56 = vector.extract_strided_slice %23 {offsets = [48, 0], sizes = [8, 128], strides = [1, 1]} : vector<80x128xf32> to vector<8x128xf32>
      %cst_35 = arith.constant dense<0.000000e+00> : vector<8x128xf32>
      %57 = tpu.matmul %54, %24, %cst_35 {dimension_numbers = #tpu.dot_dimension_numbers<[1], [0], [0], [1], [0, 0, 1, 1], [], []>} : vector<8x128xf32>, vector<128x128xf32>, vector<8x128xf32> -> vector<8x128xf32>
      %58 = arith.addf %56, %57 : vector<8x128xf32>
      %59 = math.tanh %58 : vector<8x128xf32>
      %c0_36 = arith.constant 0 : index
      %c768 = arith.constant 768 : index
      %60 = vector.load %arg9[%c0_36, %c768] : memref<8x1280xf32, #tpu.memory_space<vmem>>, vector<8x128xf32>
      tpu.vector_store %arg9[%c0_36, %c768], %59 {strides = array<i32>} : memref<8x1280xf32, #tpu.memory_space<vmem>>, vector<8x128xf32>,
      %61 = vector.extract_strided_slice %23 {offsets = [56, 0], sizes = [8, 128], strides = [1, 1]} : vector<80x128xf32> to vector<8x128xf32>
      %cst_37 = arith.constant dense<0.000000e+00> : vector<8x128xf32>
      %62 = tpu.matmul %59, %24, %cst_37 {dimension_numbers = #tpu.dot_dimension_numbers<[1], [0], [0], [1], [0, 0, 1, 1], [], []>} : vector<8x128xf32>, vector<128x128xf32>, vector<8x128xf32> -> vector<8x128xf32>
      %63 = arith.addf %61, %62 : vector<8x128xf32>
      %64 = math.tanh %63 : vector<8x128xf32>
      %c0_38 = arith.constant 0 : index
      %c896 = arith.constant 896 : index
      %65 = vector.load %arg9[%c0_38, %c896] : memref<8x1280xf32, #tpu.memory_space<vmem>>, vector<8x128xf32>
      tpu.vector_store %arg9[%c0_38, %c896], %64 {strides = array<i32>} : memref<8x1280xf32, #tpu.memory_space<vmem>>, vector<8x128xf32>,
      %66 = vector.extract_strided_slice %23 {offsets = [64, 0], sizes = [8, 128], strides = [1, 1]} : vector<80x128xf32> to vector<8x128xf32>
      %cst_39 = arith.constant dense<0.000000e+00> : vector<8x128xf32>
      %67 = tpu.matmul %64, %24, %cst_39 {dimension_numbers = #tpu.dot_dimension_numbers<[1], [0], [0], [1], [0, 0, 1, 1], [], []>} : vector<8x128xf32>, vector<128x128xf32>, vector<8x128xf32> -> vector<8x128xf32>
      %68 = arith.addf %66, %67 : vector<8x128xf32>
      %69 = math.tanh %68 : vector<8x128xf32>
      %c0_40 = arith.constant 0 : index
      %c1024 = arith.constant 1024 : index
      %70 = vector.load %arg9[%c0_40, %c1024] : memref<8x1280xf32, #tpu.memory_space<vmem>>, vector<8x128xf32>
      tpu.vector_store %arg9[%c0_40, %c1024], %69 {strides = array<i32>} : memref<8x1280xf32, #tpu.memory_space<vmem>>, vector<8x128xf32>,
      %71 = vector.extract_strided_slice %23 {offsets = [72, 0], sizes = [8, 128], strides = [1, 1]} : vector<80x128xf32> to vector<8x128xf32>
      %cst_41 = arith.constant dense<0.000000e+00> : vector<8x128xf32>
      %72 = tpu.matmul %69, %24, %cst_41 {dimension_numbers = #tpu.dot_dimension_numbers<[1], [0], [0], [1], [0, 0, 1, 1], [], []>} : vector<8x128xf32>, vector<128x128xf32>, vector<8x128xf32> -> vector<8x128xf32>
      %73 = arith.addf %71, %72 : vector<8x128xf32>
      %74 = math.tanh %73 : vector<8x128xf32>
      %c0_42 = arith.constant 0 : index
      %c1152 = arith.constant 1152 : index
      %75 = vector.load %arg9[%c0_42, %c1152] : memref<8x1280xf32, #tpu.memory_space<vmem>>, vector<8x128xf32>
      tpu.vector_store %arg9[%c0_42, %c1152], %74 {strides = array<i32>} : memref<8x1280xf32, #tpu.memory_space<vmem>>, vector<8x128xf32>,
    } else {
    }
    %c0 = arith.constant 0 : index
    %c0_1 = arith.constant 0 : index
    %3 = vector.load %arg9[%c0, %c0_1] : memref<8x1280xf32, #tpu.memory_space<vmem>>, vector<8x1280xf32>
    %c0_2 = arith.constant 0 : index
    %c0_3 = arith.constant 0 : index
    %c0_4 = arith.constant 0 : index
    %4 = vector.load %arg6[%c0_2, %c0_3, %c0_4] : memref<1x1280x256xf32, #tpu.memory_space<vmem>>, vector<1x1280x256xf32>
    %5 = vector.shape_cast %4 : vector<1x1280x256xf32> to vector<1280x256xf32>
    %cst = arith.constant dense<0.000000e+00> : vector<8x256xf32>
    %6 = tpu.matmul %3, %5, %cst {dimension_numbers = #tpu.dot_dimension_numbers<[1], [0], [0], [1], [0, 0, 1, 1], [], []>} : vector<8x1280xf32>, vector<1280x256xf32>, vector<8x256xf32> -> vector<8x256xf32>
    %c0_5 = arith.constant 0 : index
    %c0_6 = arith.constant 0 : index
    %7 = vector.load %arg7[%c0_5, %c0_6] : memref<1x256xf32, #tpu.memory_space<vmem>>, vector<1x256xf32>
    %8 = vector.broadcast %7 : vector<1x256xf32> to vector<8x256xf32>
    %9 = arith.addf %6, %8 : vector<8x256xf32>
    %c0_7 = arith.constant 0 : index
    %c0_8 = arith.constant 0 : index
    %10 = vector.load %arg8[%c0_7, %c0_8] : memref<8x256xf32, #tpu.memory_space<vmem>>, vector<8x256xf32>
    tpu.vector_store %arg8[%c0_7, %c0_8], %9 {strides = array<i32>} : memref<8x256xf32, #tpu.memory_space<vmem>>, vector<8x256xf32>,
    return
  }
  func.func @transform_0(%arg0: i32) -> (i32, i32) {
    %c0_i32 = arith.constant 0 : i32
    %c0_i32_0 = arith.constant 0 : i32
    %c0_i32_1 = arith.constant 0 : i32
    return %c0_i32, %c0_i32_0 : i32, i32
  }
  func.func @transform_1(%arg0: i32) -> (i32, i32) {
    %c0_i32 = arith.constant 0 : i32
    %c0_i32_0 = arith.constant 0 : i32
    %c0_i32_1 = arith.constant 0 : i32
    return %c0_i32, %c0_i32_0 : i32, i32
  }
  func.func @transform_2(%arg0: i32) -> (i32, i32) {
    %c0_i32 = arith.constant 0 : i32
    %c0_i32_0 = arith.constant 0 : i32
    %c0_i32_1 = arith.constant 0 : i32
    return %c0_i32, %c0_i32_0 : i32, i32
  }
  func.func @transform_3(%arg0: i32) -> (i32, i32) {
    %c0_i32 = arith.constant 0 : i32
    %c0_i32_0 = arith.constant 0 : i32
    %c0_i32_1 = arith.constant 0 : i32
    return %c0_i32, %c0_i32_0 : i32, i32
  }
  func.func @transform_4(%arg0: i32) -> (i32, i32) {
    %c0_i32 = arith.constant 0 : i32
    %c0_i32_0 = arith.constant 0 : i32
    %c0_i32_1 = arith.constant 0 : i32
    return %c0_i32, %c0_i32_0 : i32, i32
  }
  func.func @transform_5(%arg0: i32) -> (i32, i32, i32) {
    %c0_i32 = arith.constant 0 : i32
    %c0_i32_0 = arith.constant 0 : i32
    %c0_i32_1 = arith.constant 0 : i32
    return %arg0, %c0_i32, %c0_i32_0 : i32, i32, i32
  }
  func.func @transform_6(%arg0: i32) -> (i32, i32) {
    %c0_i32 = arith.constant 0 : i32
    %c0_i32_0 = arith.constant 0 : i32
    return %c0_i32, %arg0 : i32, i32
  }
  func.func @transform_7(%arg0: i32) -> (i32, i32) {
    %c0_i32 = arith.constant 0 : i32
    %c0_i32_0 = arith.constant 0 : i32
    return %c0_i32, %arg0 : i32, i32
  }
}

</mosaic_0001>

<llo_original>
// kernel: tpu_custom_call.1
$region0: #{tpu_custom_call.1}
  #allocation0 [shape = 'u32[]', space=smem, size = 0x4, offset = 0x4, fixed_abs, tag = 'smem constant byte address 0x4 - core index']
  #allocation1 [shape = 'u32[144,128]{1,0:T(1,128)}', space=vmem, size = 0x12000, scoped, tag = 'internal scratch']
  #allocation2 [shape = 'f32[8,1280]{1,0:T(8,128)}', space=vmem, size = 0xa000, scoped, tag = 'scratch operand']
  %s0 = inlined_call_operand.vmem [shape: s32[80,1], index: 0, kind: input, shape index: {}]
  %s1 = inlined_call_operand.hbm [shape: f32[128,128], index: 1, kind: input, shape index: {}]
  %s2 = inlined_call_operand.hbm [shape: f32[128,128], index: 2, kind: input, shape index: {}]
  %s3 = inlined_call_operand.hbm [shape: f32[128,128], index: 3, kind: input, shape index: {}]
  %s4 = inlined_call_operand.hbm [shape: f32[1,128], index: 4, kind: input, shape index: {}]
  %s5 = inlined_call_operand.hbm [shape: f32[1,1280,256], index: 5, kind: input, shape index: {}]
  %s6 = inlined_call_operand.hbm [shape: f32[1,256], index: 6, kind: input, shape index: {}]
  %s7 = inlined_call_operand.hbm [shape: f32[8,256], index: 7, kind: output, shape index: {}]
  %s8 = sld [smem:[#allocation0]]
  $region66: #{tpu_custom_call.1} parent=0
    _
  %s10 = ssub.s32 1, %s8
  %s11 = scalar_select 0, %s10, %s8
  $region1: #{tpu_custom_call.1} parent=0
    #allocation3 [shape = 'u8[65536]{0}', space=vmem, size = 0x10000, scoped, tag = 'input window, operand 1, single buffered']
    #allocation4 [shape = 's32[1]{0}', space=sflag, size = 0x4, scoped, tag = 'scoped memory for tpu_custom_call.1']
    #allocation5 [shape = 's32[1]{0}', space=sflag, size = 0x4, scoped, tag = 'scoped memory for tpu_custom_call.1']
    #allocation6 [shape = 'u8[65536]{0}', space=vmem, size = 0x10000, scoped, tag = 'input window, operand 2, single buffered']
    #allocation7 [shape = 's32[1]{0}', space=sflag, size = 0x4, scoped, tag = 'scoped memory for tpu_custom_call.1']
    #allocation8 [shape = 'u8[65536]{0}', space=vmem, size = 0x10000, scoped, tag = 'input window, operand 3, single buffered']
    #allocation9 [shape = 'u8[512]{0}', space=vmem, size = 0x400, scoped, tag = 'input window, operand 4, single buffered']
    #allocation10 [shape = 's32[1]{0}', space=sflag, size = 0x4, scoped, tag = 'scoped memory for tpu_custom_call.1']
    #allocation11 [shape = 'u8[1310720]{0}', space=vmem, size = 0x140000, scoped, tag = 'input window, operand 5, single buffered']
    #allocation12 [shape = 'u8[1024]{0}', space=vmem, size = 0x400, scoped, tag = 'input window, operand 6, single buffered']
    #allocation13 [shape = 's32[1]{0}', space=sflag, size = 0x4, scoped, tag = 'scoped memory for tpu_custom_call.1']
    #allocation14 [shape = 'u8[8192]{0}', space=vmem, size = 0x2000, scoped, tag = 'output window, operand 0, single buffered']
    %12 = vsyncpa [#allocation4], 0
    %13 = vsyncpa [#allocation7], 0
    %14 = vsyncpa [#allocation10], 0
    %15 = vsyncpa [#allocation13], 0
    %16 = vsyncpa [#allocation5], 0
    // Predicated region
    $region2: #{tpu_custom_call.1} parent=1 // pred_check
      _
    $region3: #{tpu_custom_call.1} parent=1 // pred_check_branch
      %18 = sbr.rel (0) target = $region5
    $region4: #{tpu_custom_call.1} parent=1 // pred_region
      _
    $region5: #{tpu_custom_call.1} parent=1 // pred_fallthru
      _
    // Predicated region
    $region6: #{tpu_custom_call.1} parent=1 // pred_check
      _
    $region7: #{tpu_custom_call.1} parent=1 // pred_check_branch
      %20 = sbr.rel (0) target = $region9
    $region8: #{tpu_custom_call.1} parent=1 // pred_region
      %s22 = ssub.s32 2048, 2048
      %23 = vsyncadd [#allocation4], %s22
      %s24 = sshll.u32 [#allocation3], 4
      %s25 = int_to_ptr.vmem [resolvable:$true] %s24
      %30 = dma.hbm_to_vmem [thread:$0]  %s1, 2048, %s25, [#allocation4], 128, 128, 8
    $region9: #{tpu_custom_call.1} parent=1 // pred_fallthru
      _
    // Predicated region
    $region10: #{tpu_custom_call.1} parent=1 // pred_check
      _
    $region11: #{tpu_custom_call.1} parent=1 // pred_check_branch
      %32 = sbr.rel (0) target = $region13
    $region12: #{tpu_custom_call.1} parent=1 // pred_region
      %s34 = ssub.s32 2048, 2048
      %35 = vsyncadd [#allocation7], %s34
      %s36 = sshll.u32 [#allocation6], 4
      %s37 = int_to_ptr.vmem [resolvable:$true] %s36
      %42 = dma.hbm_to_vmem [thread:$0]  %s2, 2048, %s37, [#allocation7], 128, 128, 8
    $region13: #{tpu_custom_call.1} parent=1 // pred_fallthru
      _
    // Predicated region
    $region14: #{tpu_custom_call.1} parent=1 // pred_check
      _
    $region15: #{tpu_custom_call.1} parent=1 // pred_check_branch
      %44 = sbr.rel (0) target = $region17
    $region16: #{tpu_custom_call.1} parent=1 // pred_region
      %s46 = ssub.s32 2048, 2048
      %47 = vsyncadd [#allocation7], %s46
      %s48 = sshll.u32 [#allocation8], 4
      %s49 = int_to_ptr.vmem [resolvable:$true] %s48
      %54 = dma.hbm_to_vmem [thread:$0]  %s3, 2048, %s49, [#allocation7], 128, 128, 8
    $region17: #{tpu_custom_call.1} parent=1 // pred_fallthru
      _
    // Predicated region
    $region18: #{tpu_custom_call.1} parent=1 // pred_check
      _
    $region19: #{tpu_custom_call.1} parent=1 // pred_check_branch
      %56 = sbr.rel (0) target = $region21
    $region20: #{tpu_custom_call.1} parent=1 // pred_region
      %s58 = ssub.s32 16, 16
      %59 = vsyncadd [#allocation10], %s58
      %s61 = sshll.u32 [#allocation9], 4
      %s62 = int_to_ptr.vmem [resolvable:$true] %s61
      %64 = dma.hbm_to_vmem [thread:$0]  %s4, 16, %s62, [#allocation10]
    $region21: #{tpu_custom_call.1} parent=1 // pred_fallthru
      _
    // Predicated region
    $region22: #{tpu_custom_call.1} parent=1 // pred_check
      _
    $region23: #{tpu_custom_call.1} parent=1 // pred_check_branch
      %66 = sbr.rel (0) target = $region25
    $region24: #{tpu_custom_call.1} parent=1 // pred_region
      %s68 = ssub.s32 40960, 40960
      %69 = vsyncadd [#allocation10], %s68
      %s70 = sshll.u32 [#allocation11], 4
      %s71 = int_to_ptr.vmem [resolvable:$true] %s70
      %76 = dma.hbm_to_vmem [thread:$0]  %s5, 40960, %s71, [#allocation10], 256, 256, 16
    $region25: #{tpu_custom_call.1} parent=1 // pred_fallthru
      _
    // Predicated region
    $region26: #{tpu_custom_call.1} parent=1 // pred_check
      _
    $region27: #{tpu_custom_call.1} parent=1 // pred_check_branch
      %78 = sbr.rel (0) target = $region29
    $region28: #{tpu_custom_call.1} parent=1 // pred_region
      %s80 = ssub.s32 32, 32
      %81 = vsyncadd [#allocation13], %s80
      %s83 = sshll.u32 [#allocation12], 4
      %s84 = int_to_ptr.vmem [resolvable:$true] %s83
      %86 = dma.hbm_to_vmem [thread:$0]  %s6, 32, %s84, [#allocation13]
    $region29: #{tpu_custom_call.1} parent=1 // pred_fallthru
      _
    // Predicated region
    $region30: #{tpu_custom_call.1} parent=1 // pred_check
      _
    $region31: #{tpu_custom_call.1} parent=1 // pred_check_branch
      %88 = sbr.rel (0) target = $region33
    $region32: #{tpu_custom_call.1} parent=1 // pred_region
      %89 = dma.done [#allocation4], 2048
    $region33: #{tpu_custom_call.1} parent=1 // pred_fallthru
      _
    // Predicated region
    $region34: #{tpu_custom_call.1} parent=1 // pred_check
      _
    $region35: #{tpu_custom_call.1} parent=1 // pred_check_branch
      %91 = sbr.rel (0) target = $region37
    $region36: #{tpu_custom_call.1} parent=1 // pred_region
      %92 = dma.done [#allocation7], 2048
    $region37: #{tpu_custom_call.1} parent=1 // pred_fallthru
      _
    // Predicated region
    $region38: #{tpu_custom_call.1} parent=1 // pred_check
      _
    $region39: #{tpu_custom_call.1} parent=1 // pred_check_branch
      %94 = sbr.rel (0) target = $region41
    $region40: #{tpu_custom_call.1} parent=1 // pred_region
      %95 = dma.done [#allocation7], 2048
    $region41: #{tpu_custom_call.1} parent=1 // pred_fallthru
      _
    // Predicated region
    $region42: #{tpu_custom_call.1} parent=1 // pred_check
      _
    $region43: #{tpu_custom_call.1} parent=1 // pred_check_branch
      %97 = sbr.rel (0) target = $region45
    $region44: #{tpu_custom_call.1} parent=1 // pred_region
      %98 = dma.done [#allocation10], 16
    $region45: #{tpu_custom_call.1} parent=1 // pred_fallthru
      _
    // Predicated region
    $region46: #{tpu_custom_call.1} parent=1 // pred_check
      _
    $region47: #{tpu_custom_call.1} parent=1 // pred_check_branch
      %100 = sbr.rel (0) target = $region49
    $region48: #{tpu_custom_call.1} parent=1 // pred_region
      %101 = dma.done [#allocation10], 40960
    $region49: #{tpu_custom_call.1} parent=1 // pred_fallthru
      _
    // Predicated region
    $region50: #{tpu_custom_call.1} parent=1 // pred_check
      _
    $region51: #{tpu_custom_call.1} parent=1 // pred_check_branch
      %103 = sbr.rel (0) target = $region53
    $region52: #{tpu_custom_call.1} parent=1 // pred_region
      %104 = dma.done [#allocation13], 32
    $region53: #{tpu_custom_call.1} parent=1 // pred_fallthru
      _
    %p105 = scmp.eq.s32.totalorder 0, 0
    // Predicated region
    $region54: #{tpu_custom_call.1} parent=1 // pred_check
      %p106 = pneg %p105
    $region55: #{tpu_custom_call.1} parent=1 // pred_check_branch
      %108 = sbr.rel (%p106) target = $region57
    $region56: #{tpu_custom_call.1} parent=1 // pred_region
      %v109 = vld [vmem:[%s0] sm:$0xff]
      %v110 = vld [vmem:[%s0 + $0x8] sm:$0xff]
      %v111 = vld [vmem:[%s0 + $0x10] sm:$0xff]
      %v112 = vld [vmem:[%s0 + $0x18] sm:$0xff]
      %v113 = vld [vmem:[%s0 + $0x20] sm:$0xff]
      %v114 = vld [vmem:[%s0 + $0x28] sm:$0xff]
      %v115 = vld [vmem:[%s0 + $0x30] sm:$0xff]
      %v116 = vld [vmem:[%s0 + $0x38] sm:$0xff]
      %v117 = vld [vmem:[%s0 + $0x40] sm:$0xff]
      %v118 = vld [vmem:[%s0 + $0x48] sm:$0xff]
      %v119 = vlaneseq
      %v120 = vand.u32 %v119, 127
      %121 = vset.pattern.permute.xlu0 0
      %122 = vperm.xlu0 %121, %v109
      %v123 = vpop.permute.xlu0 %122
      %124 = vset.pattern.permute.xlu0 0
      %125 = vperm.xlu0 %124, %v110
      %v126 = vpop.permute.xlu0 %125
      %127 = vset.pattern.permute.xlu0 0
      %128 = vperm.xlu0 %127, %v111
      %v129 = vpop.permute.xlu0 %128
      %130 = vset.pattern.permute.xlu0 0
      %131 = vperm.xlu0 %130, %v112
      %v132 = vpop.permute.xlu0 %131
      %133 = vset.pattern.permute.xlu0 0
      %134 = vperm.xlu0 %133, %v113
      %v135 = vpop.permute.xlu0 %134
      %136 = vset.pattern.permute.xlu0 0
      %137 = vperm.xlu0 %136, %v114
      %v138 = vpop.permute.xlu0 %137
      %139 = vset.pattern.permute.xlu0 0
      %140 = vperm.xlu0 %139, %v115
      %v141 = vpop.permute.xlu0 %140
      %142 = vset.pattern.permute.xlu0 0
      %143 = vperm.xlu0 %142, %v116
      %v144 = vpop.permute.xlu0 %143
      %145 = vset.pattern.permute.xlu0 0
      %146 = vperm.xlu0 %145, %v117
      %v147 = vpop.permute.xlu0 %146
      %148 = vset.pattern.permute.xlu0 0
      %149 = vperm.xlu0 %148, %v118
      %v150 = vpop.permute.xlu0 %149
      %vm151 = vcmp.eq.s32.totalorder %v120, %v123
      %vm152 = vcmp.eq.s32.totalorder %v120, %v126
      %vm153 = vcmp.eq.s32.totalorder %v120, %v129
      %vm154 = vcmp.eq.s32.totalorder %v120, %v132
      %vm155 = vcmp.eq.s32.totalorder %v120, %v135
      %vm156 = vcmp.eq.s32.totalorder %v120, %v138
      %vm157 = vcmp.eq.s32.totalorder %v120, %v141
      %vm158 = vcmp.eq.s32.totalorder %v120, %v144
      %vm159 = vcmp.eq.s32.totalorder %v120, %v147
      %vm160 = vcmp.eq.s32.totalorder %v120, %v150
      %v161 = vsel %vm151, 1, 0
      %v162 = vsel %vm152, 1, 0
      %v163 = vsel %vm153, 1, 0
      %v164 = vsel %vm154, 1, 0
      %v165 = vsel %vm155, 1, 0
      %v166 = vsel %vm156, 1, 0
      %v167 = vsel %vm157, 1, 0
      %v168 = vsel %vm158, 1, 0
      %v169 = vsel %vm159, 1, 0
      %v170 = vsel %vm160, 1, 0
      %v171 = vcvt.s32.f32 %v161
      %v172 = vcvt.s32.f32 %v162
      %v173 = vcvt.s32.f32 %v163
      %v174 = vcvt.s32.f32 %v164
      %v175 = vcvt.s32.f32 %v165
      %v176 = vcvt.s32.f32 %v166
      %v177 = vcvt.s32.f32 %v167
      %v178 = vcvt.s32.f32 %v168
      %v179 = vcvt.s32.f32 %v169
      %v180 = vcvt.s32.f32 %v170
      %v181 = vld [vmem:[#allocation3] sm:$0xff]
      %v182 = vld [vmem:[#allocation3 + $0x8] sm:$0xff]
      %v183 = vld [vmem:[#allocation3 + $0x10] sm:$0xff]
      %v184 = vld [vmem:[#allocation3 + $0x18] sm:$0xff]
      %v185 = vld [vmem:[#allocation3 + $0x20] sm:$0xff]
      %v186 = vld [vmem:[#allocation3 + $0x28] sm:$0xff]
      %v187 = vld [vmem:[#allocation3 + $0x30] sm:$0xff]
      %v188 = vld [vmem:[#allocation3 + $0x38] sm:$0xff]
      %v189 = vld [vmem:[#allocation3 + $0x40] sm:$0xff]
      %v190 = vld [vmem:[#allocation3 + $0x48] sm:$0xff]
      %v191 = vld [vmem:[#allocation3 + $0x50] sm:$0xff]
      %v192 = vld [vmem:[#allocation3 + $0x58] sm:$0xff]
      %v193 = vld [vmem:[#allocation3 + $0x60] sm:$0xff]
      %v194 = vld [vmem:[#allocation3 + $0x68] sm:$0xff]
      %v195 = vld [vmem:[#allocation3 + $0x70] sm:$0xff]
      %v196 = vld [vmem:[#allocation3 + $0x78] sm:$0xff]
      %197 = vmatprep.subr.mxu0 0.0
      %198 = vmatpush1.msra.mxu0 %v196
      %199 = vmatprep.subr.mxu0 0.0
      %200 = vmatpush1.msra.mxu0 %v195
      %201 = vmatprep.subr.mxu0 0.0
      %202 = vmatpush1.msra.mxu0 %v194
      %203 = vmatprep.subr.mxu0 0.0
      %204 = vmatpush1.msra.mxu0 %v193
      %205 = vmatprep.subr.mxu0 0.0
      %206 = vmatpush1.msra.mxu0 %v192
      %207 = vmatprep.subr.mxu0 0.0
      %208 = vmatpush1.msra.mxu0 %v191
      %209 = vmatprep.subr.mxu0 0.0
      %210 = vmatpush1.msra.mxu0 %v190
      %211 = vmatprep.subr.mxu0 0.0
      %212 = vmatpush1.msra.mxu0 %v189
      %213 = vmatprep.subr.mxu0 0.0
      %214 = vmatpush1.msra.mxu0 %v188
      %215 = vmatprep.subr.mxu0 0.0
      %216 = vmatpush1.msra.mxu0 %v187
      %217 = vmatprep.subr.mxu0 0.0
      %218 = vmatpush1.msra.mxu0 %v186
      %219 = vmatprep.subr.mxu0 0.0
      %220 = vmatpush1.msra.mxu0 %v185
      %221 = vmatprep.subr.mxu0 0.0
      %222 = vmatpush1.msra.mxu0 %v184
      %223 = vmatprep.subr.mxu0 0.0
      %224 = vmatpush1.msra.mxu0 %v183
      %225 = vmatprep.subr.mxu0 0.0
      %226 = vmatpush1.msra.mxu0 %v182
      %227 = vmatprep.subr.mxu0 0.0
      %228 = vmatpush1.msra.mxu0 %v181
      %229 = vmatprep.subr.mxu0 0.0
      %230 = vmatpush2.msra.mxu0 0.0
      %231 = vmatprep.subr.mxu0 0.0
      %232 = vmatpush2.msra.mxu0 0.0
      %233 = vmatprep.subr.mxu0 0.0
      %234 = vmatpush2.msra.mxu0 0.0
      %235 = vmatprep.subr.mxu0 0.0
      %236 = vmatpush2.msra.mxu0 0.0
      %237 = vmatprep.subr.mxu0 0.0
      %238 = vmatpush2.msra.mxu0 0.0
      %239 = vmatprep.subr.mxu0 0.0
      %240 = vmatpush2.msra.mxu0 0.0
      %241 = vmatprep.subr.mxu0 0.0
      %242 = vmatpush2.msra.mxu0 0.0
      %243 = vmatprep.subr.mxu0 0.0
      %244 = vmatpush2.msra.mxu0 0.0
      %245 = vmatprep.subr.mxu0 0.0
      %246 = vmatpush2.msra.mxu0 0.0
      %247 = vmatprep.subr.mxu0 0.0
      %248 = vmatpush2.msra.mxu0 0.0
      %249 = vmatprep.subr.mxu0 0.0
      %250 = vmatpush2.msra.mxu0 0.0
      %251 = vmatprep.subr.mxu0 0.0
      %252 = vmatpush2.msra.mxu0 0.0
      %253 = vmatprep.subr.mxu0 0.0
      %254 = vmatpush2.msra.mxu0 0.0
      %255 = vmatprep.subr.mxu0 0.0
      %256 = vmatpush2.msra.mxu0 0.0
      %257 = vmatprep.subr.mxu0 0.0
      %258 = vmatpush2.msra.mxu0 0.0
      %259 = vmatprep.subr.mxu0 0.0
      %260 = vmatpush2.msra.mxu0 0.0
      %261 = vmatprep.mubr.f32.mxu0 0.0
      %262 = vmatmul.mubr.f32.gmra.mxu0 %v171
      %v263 = vpop.f32.mrf.mxu0
      %v264 = vadd.f32 0.0, %v263
      %v265 = vpop.f32.mrf.mxu0
      %266 = vmatprep.mubr.f32.mxu0 0.0
      %267 = vmatmul.mubr.f32.gmra.mxu0 %v172
      %v268 = vpop.f32.mrf.mxu0
      %v269 = vadd.f32 0.0, %v268
      %v270 = vpop.f32.mrf.mxu0
      %271 = vmatprep.mubr.f32.mxu0 0.0
      %272 = vmatmul.mubr.f32.gmra.mxu0 %v173
      %v273 = vpop.f32.mrf.mxu0
      %v274 = vadd.f32 0.0, %v273
      %v275 = vpop.f32.mrf.mxu0
      %276 = vmatprep.mubr.f32.mxu0 0.0
      %277 = vmatmul.mubr.f32.gmra.mxu0 %v174
      %v278 = vpop.f32.mrf.mxu0
      %v279 = vadd.f32 0.0, %v278
      %v280 = vpop.f32.mrf.mxu0
      %281 = vmatprep.mubr.f32.mxu0 0.0
      %282 = vmatmul.mubr.f32.gmra.mxu0 %v175
      %v283 = vpop.f32.mrf.mxu0
      %v284 = vadd.f32 0.0, %v283
      %v285 = vpop.f32.mrf.mxu0
      %286 = vmatprep.mubr.f32.mxu0 0.0
      %287 = vmatmul.mubr.f32.gmra.mxu0 %v176
      %v288 = vpop.f32.mrf.mxu0
      %v289 = vadd.f32 0.0, %v288
      %v290 = vpop.f32.mrf.mxu0
      %291 = vmatprep.mubr.f32.mxu0 0.0
      %292 = vmatmul.mubr.f32.gmra.mxu0 %v177
      %v293 = vpop.f32.mrf.mxu0
      %v294 = vadd.f32 0.0, %v293
      %v295 = vpop.f32.mrf.mxu0
      %296 = vmatprep.mubr.f32.mxu0 0.0
      %297 = vmatmul.mubr.f32.gmra.mxu0 %v178
      %v298 = vpop.f32.mrf.mxu0
      %v299 = vadd.f32 0.0, %v298
      %v300 = vpop.f32.mrf.mxu0
      %301 = vmatprep.mubr.f32.mxu0 0.0
      %302 = vmatmul.mubr.f32.gmra.mxu0 %v179
      %v303 = vpop.f32.mrf.mxu0
      %v304 = vadd.f32 0.0, %v303
      %v305 = vpop.f32.mrf.mxu0
      %306 = vmatprep.mubr.f32.mxu0 0.0
      %307 = vmatmul.mubr.f32.gmra.mxu0 %v180
      %v308 = vpop.f32.mrf.mxu0
      %v309 = vadd.f32 0.0, %v308
      %v310 = vpop.f32.mrf.mxu0
      %311 = vdwg.mxu0
      %v312 = vld [vmem:[#allocation6] sm:$0xff]
      %v313 = vld [vmem:[#allocation6 + $0x8] sm:$0xff]
      %v314 = vld [vmem:[#allocation6 + $0x10] sm:$0xff]
      %v315 = vld [vmem:[#allocation6 + $0x18] sm:$0xff]
      %v316 = vld [vmem:[#allocation6 + $0x20] sm:$0xff]
      %v317 = vld [vmem:[#allocation6 + $0x28] sm:$0xff]
      %v318 = vld [vmem:[#allocation6 + $0x30] sm:$0xff]
      %v319 = vld [vmem:[#allocation6 + $0x38] sm:$0xff]
      %v320 = vld [vmem:[#allocation6 + $0x40] sm:$0xff]
      %v321 = vld [vmem:[#allocation6 + $0x48] sm:$0xff]
      %v322 = vld [vmem:[#allocation6 + $0x50] sm:$0xff]
      %v323 = vld [vmem:[#allocation6 + $0x58] sm:$0xff]
      %v324 = vld [vmem:[#allocation6 + $0x60] sm:$0xff]
      %v325 = vld [vmem:[#allocation6 + $0x68] sm:$0xff]
      %v326 = vld [vmem:[#allocation6 + $0x70] sm:$0xff]
      %v327 = vld [vmem:[#allocation6 + $0x78] sm:$0xff]
      %v328 = vld [vmem:[#allocation9] sm:$0x1]
      %v330 = vlaneseq
      %v331 = vshrl.u32 %v330, 7
      %v332 = vsub.s32 0, %v331
      %v333 = vrot.slane %v328, %v332
      %335 = vmatprep.subr.mxu0 0.0
      %336 = vmatpush1.msra.mxu0 %v327
      %337 = vmatprep.subr.mxu0 0.0
      %338 = vmatpush1.msra.mxu0 %v326
      %339 = vmatprep.subr.mxu0 0.0
      %340 = vmatpush1.msra.mxu0 %v325
      %341 = vmatprep.subr.mxu0 0.0
      %342 = vmatpush1.msra.mxu0 %v324
      %343 = vmatprep.subr.mxu0 0.0
      %344 = vmatpush1.msra.mxu0 %v323
      %345 = vmatprep.subr.mxu0 0.0
      %346 = vmatpush1.msra.mxu0 %v322
      %347 = vmatprep.subr.mxu0 0.0
      %348 = vmatpush1.msra.mxu0 %v321
      %349 = vmatprep.subr.mxu0 0.0
      %350 = vmatpush1.msra.mxu0 %v320
      %351 = vmatprep.subr.mxu0 0.0
      %352 = vmatpush1.msra.mxu0 %v319
      %353 = vmatprep.subr.mxu0 0.0
      %354 = vmatpush1.msra.mxu0 %v318
      %355 = vmatprep.subr.mxu0 0.0
      %356 = vmatpush1.msra.mxu0 %v317
      %357 = vmatprep.subr.mxu0 0.0
      %358 = vmatpush1.msra.mxu0 %v316
      %359 = vmatprep.subr.mxu0 0.0
      %360 = vmatpush1.msra.mxu0 %v315
      %361 = vmatprep.subr.mxu0 0.0
      %362 = vmatpush1.msra.mxu0 %v314
      %363 = vmatprep.subr.mxu0 0.0
      %364 = vmatpush1.msra.mxu0 %v313
      %365 = vmatprep.subr.mxu0 0.0
      %366 = vmatpush1.msra.mxu0 %v312
      %367 = vmatprep.subr.mxu0 0.0
      %368 = vmatpush2.msra.mxu0 0.0
      %369 = vmatprep.subr.mxu0 0.0
      %370 = vmatpush2.msra.mxu0 0.0
      %371 = vmatprep.subr.mxu0 0.0
      %372 = vmatpush2.msra.mxu0 0.0
      %373 = vmatprep.subr.mxu0 0.0
      %374 = vmatpush2.msra.mxu0 0.0
      %375 = vmatprep.subr.mxu0 0.0
      %376 = vmatpush2.msra.mxu0 0.0
      %377 = vmatprep.subr.mxu0 0.0
      %378 = vmatpush2.msra.mxu0 0.0
      %379 = vmatprep.subr.mxu0 0.0
      %380 = vmatpush2.msra.mxu0 0.0
      %381 = vmatprep.subr.mxu0 0.0
      %382 = vmatpush2.msra.mxu0 0.0
      %383 = vmatprep.subr.mxu0 0.0
      %384 = vmatpush2.msra.mxu0 0.0
      %385 = vmatprep.subr.mxu0 0.0
      %386 = vmatpush2.msra.mxu0 0.0
      %387 = vmatprep.subr.mxu0 0.0
      %388 = vmatpush2.msra.mxu0 0.0
      %389 = vmatprep.subr.mxu0 0.0
      %390 = vmatpush2.msra.mxu0 0.0
      %391 = vmatprep.subr.mxu0 0.0
      %392 = vmatpush2.msra.mxu0 0.0
      %393 = vmatprep.subr.mxu0 0.0
      %394 = vmatpush2.msra.mxu0 0.0
      %395 = vmatprep.subr.mxu0 0.0
      %396 = vmatpush2.msra.mxu0 0.0
      %397 = vmatprep.subr.mxu0 0.0
      %398 = vmatpush2.msra.mxu0 0.0
      %399 = vmatprep.mubr.f32.mxu0 0.0
      %400 = vmatmul.mubr.f32.gmra.mxu0 %v264
      %v401 = vpop.f32.mrf.mxu0
      %v402 = vadd.f32 %v333, %v401
      %v403 = vpop.f32.mrf.mxu0
      %404 = vmatprep.mubr.f32.mxu0 0.0
      %405 = vmatmul.mubr.f32.gmra.mxu0 %v269
      %v406 = vpop.f32.mrf.mxu0
      %v407 = vadd.f32 %v333, %v406
      %v408 = vpop.f32.mrf.mxu0
      %409 = vmatprep.mubr.f32.mxu0 0.0
      %410 = vmatmul.mubr.f32.gmra.mxu0 %v274
      %v411 = vpop.f32.mrf.mxu0
      %v412 = vadd.f32 %v333, %v411
      %v413 = vpop.f32.mrf.mxu0
      %414 = vmatprep.mubr.f32.mxu0 0.0
      %415 = vmatmul.mubr.f32.gmra.mxu0 %v279
      %v416 = vpop.f32.mrf.mxu0
      %v417 = vadd.f32 %v333, %v416
      %v418 = vpop.f32.mrf.mxu0
      %419 = vmatprep.mubr.f32.mxu0 0.0
      %420 = vmatmul.mubr.f32.gmra.mxu0 %v284
      %v421 = vpop.f32.mrf.mxu0
      %v422 = vadd.f32 %v333, %v421
      %v423 = vpop.f32.mrf.mxu0
      %424 = vmatprep.mubr.f32.mxu0 0.0
      %425 = vmatmul.mubr.f32.gmra.mxu0 %v289
      %v426 = vpop.f32.mrf.mxu0
      %v427 = vadd.f32 %v333, %v426
      %v428 = vpop.f32.mrf.mxu0
      %429 = vmatprep.mubr.f32.mxu0 0.0
      %430 = vmatmul.mubr.f32.gmra.mxu0 %v294
      %v431 = vpop.f32.mrf.mxu0
      %v432 = vadd.f32 %v333, %v431
      %v433 = vpop.f32.mrf.mxu0
      %434 = vmatprep.mubr.f32.mxu0 0.0
      %435 = vmatmul.mubr.f32.gmra.mxu0 %v299
      %v436 = vpop.f32.mrf.mxu0
      %v437 = vadd.f32 %v333, %v436
      %v438 = vpop.f32.mrf.mxu0
      %439 = vmatprep.mubr.f32.mxu0 0.0
      %440 = vmatmul.mubr.f32.gmra.mxu0 %v304
      %v441 = vpop.f32.mrf.mxu0
      %v442 = vadd.f32 %v333, %v441
      %v443 = vpop.f32.mrf.mxu0
      %444 = vmatprep.mubr.f32.mxu0 0.0
      %445 = vmatmul.mubr.f32.gmra.mxu0 %v309
      %v446 = vpop.f32.mrf.mxu0
      %v447 = vadd.f32 %v333, %v446
      %v448 = vpop.f32.mrf.mxu0
      %449 = vdwg.mxu0
      %v450 = vld [vmem:[#allocation8] sm:$0xff]
      %v451 = vld [vmem:[#allocation8 + $0x8] sm:$0xff]
      %v452 = vld [vmem:[#allocation8 + $0x10] sm:$0xff]
      %v453 = vld [vmem:[#allocation8 + $0x18] sm:$0xff]
      %v454 = vld [vmem:[#allocation8 + $0x20] sm:$0xff]
      %v455 = vld [vmem:[#allocation8 + $0x28] sm:$0xff]
      %v456 = vld [vmem:[#allocation8 + $0x30] sm:$0xff]
      %v457 = vld [vmem:[#allocation8 + $0x38] sm:$0xff]
      %v458 = vld [vmem:[#allocation8 + $0x40] sm:$0xff]
      %v459 = vld [vmem:[#allocation8 + $0x48] sm:$0xff]
      %v460 = vld [vmem:[#allocation8 + $0x50] sm:$0xff]
      %v461 = vld [vmem:[#allocation8 + $0x58] sm:$0xff]
      %v462 = vld [vmem:[#allocation8 + $0x60] sm:$0xff]
      %v463 = vld [vmem:[#allocation8 + $0x68] sm:$0xff]
      %v464 = vld [vmem:[#allocation8 + $0x70] sm:$0xff]
      %v465 = vld [vmem:[#allocation8 + $0x78] sm:$0xff]
      %466 = vmatprep.subr.mxu0 0.0
      %467 = vmatpush1.msra.mxu0 %v465
      %468 = vmatprep.subr.mxu0 0.0
      %469 = vmatpush1.msra.mxu0 %v464
      %470 = vmatprep.subr.mxu0 0.0
      %471 = vmatpush1.msra.mxu0 %v463
      %472 = vmatprep.subr.mxu0 0.0
      %473 = vmatpush1.msra.mxu0 %v462
      %474 = vmatprep.subr.mxu0 0.0
      %475 = vmatpush1.msra.mxu0 %v461
      %476 = vmatprep.subr.mxu0 0.0
      %477 = vmatpush1.msra.mxu0 %v460
      %478 = vmatprep.subr.mxu0 0.0
      %479 = vmatpush1.msra.mxu0 %v459
      %480 = vmatprep.subr.mxu0 0.0
      %481 = vmatpush1.msra.mxu0 %v458
      %482 = vmatprep.subr.mxu0 0.0
      %483 = vmatpush1.msra.mxu0 %v457
      %484 = vmatprep.subr.mxu0 0.0
      %485 = vmatpush1.msra.mxu0 %v456
      %486 = vmatprep.subr.mxu0 0.0
      %487 = vmatpush1.msra.mxu0 %v455
      %488 = vmatprep.subr.mxu0 0.0
      %489 = vmatpush1.msra.mxu0 %v454
      %490 = vmatprep.subr.mxu0 0.0
      %491 = vmatpush1.msra.mxu0 %v453
      %492 = vmatprep.subr.mxu0 0.0
      %493 = vmatpush1.msra.mxu0 %v452
      %494 = vmatprep.subr.mxu0 0.0
      %495 = vmatpush1.msra.mxu0 %v451
      %496 = vmatprep.subr.mxu0 0.0
      %497 = vmatpush1.msra.mxu0 %v450
      %498 = vmatprep.subr.mxu0 0.0
      %499 = vmatpush2.msra.mxu0 0.0
      %500 = vmatprep.subr.mxu0 0.0
      %501 = vmatpush2.msra.mxu0 0.0
      %502 = vmatprep.subr.mxu0 0.0
      %503 = vmatpush2.msra.mxu0 0.0
      %504 = vmatprep.subr.mxu0 0.0
      %505 = vmatpush2.msra.mxu0 0.0
      %506 = vmatprep.subr.mxu0 0.0
      %507 = vmatpush2.msra.mxu0 0.0
      %508 = vmatprep.subr.mxu0 0.0
      %509 = vmatpush2.msra.mxu0 0.0
      %510 = vmatprep.subr.mxu0 0.0
      %511 = vmatpush2.msra.mxu0 0.0
      %512 = vmatprep.subr.mxu0 0.0
      %513 = vmatpush2.msra.mxu0 0.0
      %514 = vmatprep.subr.mxu0 0.0
      %515 = vmatpush2.msra.mxu0 0.0
      %516 = vmatprep.subr.mxu0 0.0
      %517 = vmatpush2.msra.mxu0 0.0
      %518 = vmatprep.subr.mxu0 0.0
      %519 = vmatpush2.msra.mxu0 0.0
      %520 = vmatprep.subr.mxu0 0.0
      %521 = vmatpush2.msra.mxu0 0.0
      %522 = vmatprep.subr.mxu0 0.0
      %523 = vmatpush2.msra.mxu0 0.0
      %524 = vmatprep.subr.mxu0 0.0
      %525 = vmatpush2.msra.mxu0 0.0
      %526 = vmatprep.subr.mxu0 0.0
      %527 = vmatpush2.msra.mxu0 0.0
      %528 = vmatprep.subr.mxu0 0.0
      %529 = vmatpush2.msra.mxu0 0.0
      %530 = vmatprep.mubr.f32.mxu0 0.0
      %531 = vmatmul.mubr.f32.gmra.mxu0 0.0
      %v532 = vpop.f32.mrf.mxu0
      %v533 = vadd.f32 0.0, %v532
      %v534 = vpop.f32.mrf.mxu0
      %535 = vdwg.mxu0
      %v536 = vadd.f32 %v402, %v533
      %v537 = vtanh.pop %v536
      %538 = vst [vmem:[#allocation2] sm:$0xff] %v537
      %539 = vmatprep.subr.mxu0 0.0
      %540 = vmatpush1.msra.mxu0 %v465
      %541 = vmatprep.subr.mxu0 0.0
      %542 = vmatpush1.msra.mxu0 %v464
      %543 = vmatprep.subr.mxu0 0.0
      %544 = vmatpush1.msra.mxu0 %v463
      %545 = vmatprep.subr.mxu0 0.0
      %546 = vmatpush1.msra.mxu0 %v462
      %547 = vmatprep.subr.mxu0 0.0
      %548 = vmatpush1.msra.mxu0 %v461
      %549 = vmatprep.subr.mxu0 0.0
      %550 = vmatpush1.msra.mxu0 %v460
      %551 = vmatprep.subr.mxu0 0.0
      %552 = vmatpush1.msra.mxu0 %v459
      %553 = vmatprep.subr.mxu0 0.0
      %554 = vmatpush1.msra.mxu0 %v458
      %555 = vmatprep.subr.mxu0 0.0
      %556 = vmatpush1.msra.mxu0 %v457
      %557 = vmatprep.subr.mxu0 0.0
      %558 = vmatpush1.msra.mxu0 %v456
      %559 = vmatprep.subr.mxu0 0.0
      %560 = vmatpush1.msra.mxu0 %v455
      %561 = vmatprep.subr.mxu0 0.0
      %562 = vmatpush1.msra.mxu0 %v454
      %563 = vmatprep.subr.mxu0 0.0
      %564 = vmatpush1.msra.mxu0 %v453
      %565 = vmatprep.subr.mxu0 0.0
      %566 = vmatpush1.msra.mxu0 %v452
      %567 = vmatprep.subr.mxu0 0.0
      %568 = vmatpush1.msra.mxu0 %v451
      %569 = vmatprep.subr.mxu0 0.0
      %570 = vmatpush1.msra.mxu0 %v450
      %571 = vmatprep.subr.mxu0 0.0
      %572 = vmatpush2.msra.mxu0 0.0
      %573 = vmatprep.subr.mxu0 0.0
      %574 = vmatpush2.msra.mxu0 0.0
      %575 = vmatprep.subr.mxu0 0.0
      %576 = vmatpush2.msra.mxu0 0.0
      %577 = vmatprep.subr.mxu0 0.0
      %578 = vmatpush2.msra.mxu0 0.0
      %579 = vmatprep.subr.mxu0 0.0
      %580 = vmatpush2.msra.mxu0 0.0
      %581 = vmatprep.subr.mxu0 0.0
      %582 = vmatpush2.msra.mxu0 0.0
      %583 = vmatprep.subr.mxu0 0.0
      %584 = vmatpush2.msra.mxu0 0.0
      %585 = vmatprep.subr.mxu0 0.0
      %586 = vmatpush2.msra.mxu0 0.0
      %587 = vmatprep.subr.mxu0 0.0
      %588 = vmatpush2.msra.mxu0 0.0
      %589 = vmatprep.subr.mxu0 0.0
      %590 = vmatpush2.msra.mxu0 0.0
      %591 = vmatprep.subr.mxu0 0.0
      %592 = vmatpush2.msra.mxu0 0.0
      %593 = vmatprep.subr.mxu0 0.0
      %594 = vmatpush2.msra.mxu0 0.0
      %595 = vmatprep.subr.mxu0 0.0
      %596 = vmatpush2.msra.mxu0 0.0
      %597 = vmatprep.subr.mxu0 0.0
      %598 = vmatpush2.msra.mxu0 0.0
      %599 = vmatprep.subr.mxu0 0.0
      %600 = vmatpush2.msra.mxu0 0.0
      %601 = vmatprep.subr.mxu0 0.0
      %602 = vmatpush2.msra.mxu0 0.0
      %603 = vmatprep.mubr.f32.mxu0 0.0
      %604 = vmatmul.mubr.f32.gmra.mxu0 %v537
      %v605 = vpop.f32.mrf.mxu0
      %v606 = vadd.f32 0.0, %v605
      %v607 = vpop.f32.mrf.mxu0
      %608 = vdwg.mxu0
      %v609 = vadd.f32 %v407, %v606
      %v610 = vtanh.pop %v609
      %611 = vst [vmem:[#allocation2 + $0x8] sm:$0xff] %v610
      %612 = vmatprep.subr.mxu0 0.0
      %613 = vmatpush1.msra.mxu0 %v465
      %614 = vmatprep.subr.mxu0 0.0
      %615 = vmatpush1.msra.mxu0 %v464
      %616 = vmatprep.subr.mxu0 0.0
      %617 = vmatpush1.msra.mxu0 %v463
      %618 = vmatprep.subr.mxu0 0.0
      %619 = vmatpush1.msra.mxu0 %v462
      %620 = vmatprep.subr.mxu0 0.0
      %621 = vmatpush1.msra.mxu0 %v461
      %622 = vmatprep.subr.mxu0 0.0
      %623 = vmatpush1.msra.mxu0 %v460
      %624 = vmatprep.subr.mxu0 0.0
      %625 = vmatpush1.msra.mxu0 %v459
      %626 = vmatprep.subr.mxu0 0.0
      %627 = vmatpush1.msra.mxu0 %v458
      %628 = vmatprep.subr.mxu0 0.0
      %629 = vmatpush1.msra.mxu0 %v457
      %630 = vmatprep.subr.mxu0 0.0
      %631 = vmatpush1.msra.mxu0 %v456
      %632 = vmatprep.subr.mxu0 0.0
      %633 = vmatpush1.msra.mxu0 %v455
      %634 = vmatprep.subr.mxu0 0.0
      %635 = vmatpush1.msra.mxu0 %v454
      %636 = vmatprep.subr.mxu0 0.0
      %637 = vmatpush1.msra.mxu0 %v453
      %638 = vmatprep.subr.mxu0 0.0
      %639 = vmatpush1.msra.mxu0 %v452
      %640 = vmatprep.subr.mxu0 0.0
      %641 = vmatpush1.msra.mxu0 %v451
      %642 = vmatprep.subr.mxu0 0.0
      %643 = vmatpush1.msra.mxu0 %v450
      %644 = vmatprep.subr.mxu0 0.0
      %645 = vmatpush2.msra.mxu0 0.0
      %646 = vmatprep.subr.mxu0 0.0
      %647 = vmatpush2.msra.mxu0 0.0
      %648 = vmatprep.subr.mxu0 0.0
      %649 = vmatpush2.msra.mxu0 0.0
      %650 = vmatprep.subr.mxu0 0.0
      %651 = vmatpush2.msra.mxu0 0.0
      %652 = vmatprep.subr.mxu0 0.0
      %653 = vmatpush2.msra.mxu0 0.0
      %654 = vmatprep.subr.mxu0 0.0
      %655 = vmatpush2.msra.mxu0 0.0
      %656 = vmatprep.subr.mxu0 0.0
      %657 = vmatpush2.msra.mxu0 0.0
      %658 = vmatprep.subr.mxu0 0.0
      %659 = vmatpush2.msra.mxu0 0.0
      %660 = vmatprep.subr.mxu0 0.0
      %661 = vmatpush2.msra.mxu0 0.0
      %662 = vmatprep.subr.mxu0 0.0
      %663 = vmatpush2.msra.mxu0 0.0
      %664 = vmatprep.subr.mxu0 0.0
      %665 = vmatpush2.msra.mxu0 0.0
      %666 = vmatprep.subr.mxu0 0.0
      %667 = vmatpush2.msra.mxu0 0.0
      %668 = vmatprep.subr.mxu0 0.0
      %669 = vmatpush2.msra.mxu0 0.0
      %670 = vmatprep.subr.mxu0 0.0
      %671 = vmatpush2.msra.mxu0 0.0
      %672 = vmatprep.subr.mxu0 0.0
      %673 = vmatpush2.msra.mxu0 0.0
      %674 = vmatprep.subr.mxu0 0.0
      %675 = vmatpush2.msra.mxu0 0.0
      %676 = vmatprep.mubr.f32.mxu0 0.0
      %677 = vmatmul.mubr.f32.gmra.mxu0 %v610
      %v678 = vpop.f32.mrf.mxu0
      %v679 = vadd.f32 0.0, %v678
      %v680 = vpop.f32.mrf.mxu0
      %681 = vdwg.mxu0
      %v682 = vadd.f32 %v412, %v679
      %v683 = vtanh.pop %v682
      %684 = vst [vmem:[#allocation2 + $0x10] sm:$0xff] %v683
      %685 = vmatprep.subr.mxu0 0.0
      %686 = vmatpush1.msra.mxu0 %v465
      %687 = vmatprep.subr.mxu0 0.0
      %688 = vmatpush1.msra.mxu0 %v464
      %689 = vmatprep.subr.mxu0 0.0
      %690 = vmatpush1.msra.mxu0 %v463
      %691 = vmatprep.subr.mxu0 0.0
      %692 = vmatpush1.msra.mxu0 %v462
      %693 = vmatprep.subr.mxu0 0.0
      %694 = vmatpush1.msra.mxu0 %v461
      %695 = vmatprep.subr.mxu0 0.0
      %696 = vmatpush1.msra.mxu0 %v460
      %697 = vmatprep.subr.mxu0 0.0
      %698 = vmatpush1.msra.mxu0 %v459
      %699 = vmatprep.subr.mxu0 0.0
      %700 = vmatpush1.msra.mxu0 %v458
      %701 = vmatprep.subr.mxu0 0.0
      %702 = vmatpush1.msra.mxu0 %v457
      %703 = vmatprep.subr.mxu0 0.0
      %704 = vmatpush1.msra.mxu0 %v456
      %705 = vmatprep.subr.mxu0 0.0
      %706 = vmatpush1.msra.mxu0 %v455
      %707 = vmatprep.subr.mxu0 0.0
      %708 = vmatpush1.msra.mxu0 %v454
      %709 = vmatprep.subr.mxu0 0.0
      %710 = vmatpush1.msra.mxu0 %v453
      %711 = vmatprep.subr.mxu0 0.0
      %712 = vmatpush1.msra.mxu0 %v452
      %713 = vmatprep.subr.mxu0 0.0
      %714 = vmatpush1.msra.mxu0 %v451
      %715 = vmatprep.subr.mxu0 0.0
      %716 = vmatpush1.msra.mxu0 %v450
      %717 = vmatprep.subr.mxu0 0.0
      %718 = vmatpush2.msra.mxu0 0.0
      %719 = vmatprep.subr.mxu0 0.0
      %720 = vmatpush2.msra.mxu0 0.0
      %721 = vmatprep.subr.mxu0 0.0
      %722 = vmatpush2.msra.mxu0 0.0
      %723 = vmatprep.subr.mxu0 0.0
      %724 = vmatpush2.msra.mxu0 0.0
      %725 = vmatprep.subr.mxu0 0.0
      %726 = vmatpush2.msra.mxu0 0.0
      %727 = vmatprep.subr.mxu0 0.0
      %728 = vmatpush2.msra.mxu0 0.0
      %729 = vmatprep.subr.mxu0 0.0
      %730 = vmatpush2.msra.mxu0 0.0
      %731 = vmatprep.subr.mxu0 0.0
      %732 = vmatpush2.msra.mxu0 0.0
      %733 = vmatprep.subr.mxu0 0.0
      %734 = vmatpush2.msra.mxu0 0.0
      %735 = vmatprep.subr.mxu0 0.0
      %736 = vmatpush2.msra.mxu0 0.0
      %737 = vmatprep.subr.mxu0 0.0
      %738 = vmatpush2.msra.mxu0 0.0
      %739 = vmatprep.subr.mxu0 0.0
      %740 = vmatpush2.msra.mxu0 0.0
      %741 = vmatprep.subr.mxu0 0.0
      %742 = vmatpush2.msra.mxu0 0.0
      %743 = vmatprep.subr.mxu0 0.0
      %744 = vmatpush2.msra.mxu0 0.0
      %745 = vmatprep.subr.mxu0 0.0
      %746 = vmatpush2.msra.mxu0 0.0
      %747 = vmatprep.subr.mxu0 0.0
      %748 = vmatpush2.msra.mxu0 0.0
      %749 = vmatprep.mubr.f32.mxu0 0.0
      %750 = vmatmul.mubr.f32.gmra.mxu0 %v683
      %v751 = vpop.f32.mrf.mxu0
      %v752 = vadd.f32 0.0, %v751
      %v753 = vpop.f32.mrf.mxu0
      %754 = vdwg.mxu0
      %v755 = vadd.f32 %v417, %v752
      %v756 = vtanh.pop %v755
      %757 = vst [vmem:[#allocation2 + $0x18] sm:$0xff] %v756
      %758 = vmatprep.subr.mxu0 0.0
      %759 = vmatpush1.msra.mxu0 %v465
      %760 = vmatprep.subr.mxu0 0.0
      %761 = vmatpush1.msra.mxu0 %v464
      %762 = vmatprep.subr.mxu0 0.0
      %763 = vmatpush1.msra.mxu0 %v463
      %764 = vmatprep.subr.mxu0 0.0
      %765 = vmatpush1.msra.mxu0 %v462
      %766 = vmatprep.subr.mxu0 0.0
      %767 = vmatpush1.msra.mxu0 %v461
      %768 = vmatprep.subr.mxu0 0.0
      %769 = vmatpush1.msra.mxu0 %v460
      %770 = vmatprep.subr.mxu0 0.0
      %771 = vmatpush1.msra.mxu0 %v459
      %772 = vmatprep.subr.mxu0 0.0
      %773 = vmatpush1.msra.mxu0 %v458
      %774 = vmatprep.subr.mxu0 0.0
      %775 = vmatpush1.msra.mxu0 %v457
      %776 = vmatprep.subr.mxu0 0.0
      %777 = vmatpush1.msra.mxu0 %v456
      %778 = vmatprep.subr.mxu0 0.0
      %779 = vmatpush1.msra.mxu0 %v455
      %780 = vmatprep.subr.mxu0 0.0
      %781 = vmatpush1.msra.mxu0 %v454
      %782 = vmatprep.subr.mxu0 0.0
      %783 = vmatpush1.msra.mxu0 %v453
      %784 = vmatprep.subr.mxu0 0.0
      %785 = vmatpush1.msra.mxu0 %v452
      %786 = vmatprep.subr.mxu0 0.0
      %787 = vmatpush1.msra.mxu0 %v451
      %788 = vmatprep.subr.mxu0 0.0
      %789 = vmatpush1.msra.mxu0 %v450
      %790 = vmatprep.subr.mxu0 0.0
      %791 = vmatpush2.msra.mxu0 0.0
      %792 = vmatprep.subr.mxu0 0.0
      %793 = vmatpush2.msra.mxu0 0.0
      %794 = vmatprep.subr.mxu0 0.0
      %795 = vmatpush2.msra.mxu0 0.0
      %796 = vmatprep.subr.mxu0 0.0
      %797 = vmatpush2.msra.mxu0 0.0
      %798 = vmatprep.subr.mxu0 0.0
      %799 = vmatpush2.msra.mxu0 0.0
      %800 = vmatprep.subr.mxu0 0.0
      %801 = vmatpush2.msra.mxu0 0.0
      %802 = vmatprep.subr.mxu0 0.0
      %803 = vmatpush2.msra.mxu0 0.0
      %804 = vmatprep.subr.mxu0 0.0
      %805 = vmatpush2.msra.mxu0 0.0
      %806 = vmatprep.subr.mxu0 0.0
      %807 = vmatpush2.msra.mxu0 0.0
      %808 = vmatprep.subr.mxu0 0.0
      %809 = vmatpush2.msra.mxu0 0.0
      %810 = vmatprep.subr.mxu0 0.0
      %811 = vmatpush2.msra.mxu0 0.0
      %812 = vmatprep.subr.mxu0 0.0
      %813 = vmatpush2.msra.mxu0 0.0
      %814 = vmatprep.subr.mxu0 0.0
      %815 = vmatpush2.msra.mxu0 0.0
      %816 = vmatprep.subr.mxu0 0.0
      %817 = vmatpush2.msra.mxu0 0.0
      %818 = vmatprep.subr.mxu0 0.0
      %819 = vmatpush2.msra.mxu0 0.0
      %820 = vmatprep.subr.mxu0 0.0
      %821 = vmatpush2.msra.mxu0 0.0
      %822 = vmatprep.mubr.f32.mxu0 0.0
      %823 = vmatmul.mubr.f32.gmra.mxu0 %v756
      %v824 = vpop.f32.mrf.mxu0
      %v825 = vadd.f32 0.0, %v824
      %v826 = vpop.f32.mrf.mxu0
      %827 = vdwg.mxu0
      %v828 = vadd.f32 %v422, %v825
      %v829 = vtanh.pop %v828
      %830 = vst [vmem:[#allocation2 + $0x20] sm:$0xff] %v829
      %831 = vmatprep.subr.mxu0 0.0
      %832 = vmatpush1.msra.mxu0 %v465
      %833 = vmatprep.subr.mxu0 0.0
      %834 = vmatpush1.msra.mxu0 %v464
      %835 = vmatprep.subr.mxu0 0.0
      %836 = vmatpush1.msra.mxu0 %v463
      %837 = vmatprep.subr.mxu0 0.0
      %838 = vmatpush1.msra.mxu0 %v462
      %839 = vmatprep.subr.mxu0 0.0
      %840 = vmatpush1.msra.mxu0 %v461
      %841 = vmatprep.subr.mxu0 0.0
      %842 = vmatpush1.msra.mxu0 %v460
      %843 = vmatprep.subr.mxu0 0.0
      %844 = vmatpush1.msra.mxu0 %v459
      %845 = vmatprep.subr.mxu0 0.0
      %846 = vmatpush1.msra.mxu0 %v458
      %847 = vmatprep.subr.mxu0 0.0
      %848 = vmatpush1.msra.mxu0 %v457
      %849 = vmatprep.subr.mxu0 0.0
      %850 = vmatpush1.msra.mxu0 %v456
      %851 = vmatprep.subr.mxu0 0.0
      %852 = vmatpush1.msra.mxu0 %v455
      %853 = vmatprep.subr.mxu0 0.0
      %854 = vmatpush1.msra.mxu0 %v454
      %855 = vmatprep.subr.mxu0 0.0
      %856 = vmatpush1.msra.mxu0 %v453
      %857 = vmatprep.subr.mxu0 0.0
      %858 = vmatpush1.msra.mxu0 %v452
      %859 = vmatprep.subr.mxu0 0.0
      %860 = vmatpush1.msra.mxu0 %v451
      %861 = vmatprep.subr.mxu0 0.0
      %862 = vmatpush1.msra.mxu0 %v450
      %863 = vmatprep.subr.mxu0 0.0
      %864 = vmatpush2.msra.mxu0 0.0
      %865 = vmatprep.subr.mxu0 0.0
      %866 = vmatpush2.msra.mxu0 0.0
      %867 = vmatprep.subr.mxu0 0.0
      %868 = vmatpush2.msra.mxu0 0.0
      %869 = vmatprep.subr.mxu0 0.0
      %870 = vmatpush2.msra.mxu0 0.0
      %871 = vmatprep.subr.mxu0 0.0
      %872 = vmatpush2.msra.mxu0 0.0
      %873 = vmatprep.subr.mxu0 0.0
      %874 = vmatpush2.msra.mxu0 0.0
      %875 = vmatprep.subr.mxu0 0.0
      %876 = vmatpush2.msra.mxu0 0.0
      %877 = vmatprep.subr.mxu0 0.0
      %878 = vmatpush2.msra.mxu0 0.0
      %879 = vmatprep.subr.mxu0 0.0
      %880 = vmatpush2.msra.mxu0 0.0
      %881 = vmatprep.subr.mxu0 0.0
      %882 = vmatpush2.msra.mxu0 0.0
      %883 = vmatprep.subr.mxu0 0.0
      %884 = vmatpush2.msra.mxu0 0.0
      %885 = vmatprep.subr.mxu0 0.0
      %886 = vmatpush2.msra.mxu0 0.0
      %887 = vmatprep.subr.mxu0 0.0
      %888 = vmatpush2.msra.mxu0 0.0
      %889 = vmatprep.subr.mxu0 0.0
      %890 = vmatpush2.msra.mxu0 0.0
      %891 = vmatprep.subr.mxu0 0.0
      %892 = vmatpush2.msra.mxu0 0.0
      %893 = vmatprep.subr.mxu0 0.0
      %894 = vmatpush2.msra.mxu0 0.0
      %895 = vmatprep.mubr.f32.mxu0 0.0
      %896 = vmatmul.mubr.f32.gmra.mxu0 %v829
      %v897 = vpop.f32.mrf.mxu0
      %v898 = vadd.f32 0.0, %v897
      %v899 = vpop.f32.mrf.mxu0
      %900 = vdwg.mxu0
      %v901 = vadd.f32 %v427, %v898
      %v902 = vtanh.pop %v901
      %903 = vst [vmem:[#allocation2 + $0x28] sm:$0xff] %v902
      %904 = vmatprep.subr.mxu0 0.0
      %905 = vmatpush1.msra.mxu0 %v465
      %906 = vmatprep.subr.mxu0 0.0
      %907 = vmatpush1.msra.mxu0 %v464
      %908 = vmatprep.subr.mxu0 0.0
      %909 = vmatpush1.msra.mxu0 %v463
      %910 = vmatprep.subr.mxu0 0.0
      %911 = vmatpush1.msra.mxu0 %v462
      %912 = vmatprep.subr.mxu0 0.0
      %913 = vmatpush1.msra.mxu0 %v461
      %914 = vmatprep.subr.mxu0 0.0
      %915 = vmatpush1.msra.mxu0 %v460
      %916 = vmatprep.subr.mxu0 0.0
      %917 = vmatpush1.msra.mxu0 %v459
      %918 = vmatprep.subr.mxu0 0.0
      %919 = vmatpush1.msra.mxu0 %v458
      %920 = vmatprep.subr.mxu0 0.0
      %921 = vmatpush1.msra.mxu0 %v457
      %922 = vmatprep.subr.mxu0 0.0
      %923 = vmatpush1.msra.mxu0 %v456
      %924 = vmatprep.subr.mxu0 0.0
      %925 = vmatpush1.msra.mxu0 %v455
      %926 = vmatprep.subr.mxu0 0.0
      %927 = vmatpush1.msra.mxu0 %v454
      %928 = vmatprep.subr.mxu0 0.0
      %929 = vmatpush1.msra.mxu0 %v453
      %930 = vmatprep.subr.mxu0 0.0
      %931 = vmatpush1.msra.mxu0 %v452
      %932 = vmatprep.subr.mxu0 0.0
      %933 = vmatpush1.msra.mxu0 %v451
      %934 = vmatprep.subr.mxu0 0.0
      %935 = vmatpush1.msra.mxu0 %v450
      %936 = vmatprep.subr.mxu0 0.0
      %937 = vmatpush2.msra.mxu0 0.0
      %938 = vmatprep.subr.mxu0 0.0
      %939 = vmatpush2.msra.mxu0 0.0
      %940 = vmatprep.subr.mxu0 0.0
      %941 = vmatpush2.msra.mxu0 0.0
      %942 = vmatprep.subr.mxu0 0.0
      %943 = vmatpush2.msra.mxu0 0.0
      %944 = vmatprep.subr.mxu0 0.0
      %945 = vmatpush2.msra.mxu0 0.0
      %946 = vmatprep.subr.mxu0 0.0
      %947 = vmatpush2.msra.mxu0 0.0
      %948 = vmatprep.subr.mxu0 0.0
      %949 = vmatpush2.msra.mxu0 0.0
      %950 = vmatprep.subr.mxu0 0.0
      %951 = vmatpush2.msra.mxu0 0.0
      %952 = vmatprep.subr.mxu0 0.0
      %953 = vmatpush2.msra.mxu0 0.0
      %954 = vmatprep.subr.mxu0 0.0
      %955 = vmatpush2.msra.mxu0 0.0
      %956 = vmatprep.subr.mxu0 0.0
      %957 = vmatpush2.msra.mxu0 0.0
      %958 = vmatprep.subr.mxu0 0.0
      %959 = vmatpush2.msra.mxu0 0.0
      %960 = vmatprep.subr.mxu0 0.0
      %961 = vmatpush2.msra.mxu0 0.0
      %962 = vmatprep.subr.mxu0 0.0
      %963 = vmatpush2.msra.mxu0 0.0
      %964 = vmatprep.subr.mxu0 0.0
      %965 = vmatpush2.msra.mxu0 0.0
      %966 = vmatprep.subr.mxu0 0.0
      %967 = vmatpush2.msra.mxu0 0.0
      %968 = vmatprep.mubr.f32.mxu0 0.0
      %969 = vmatmul.mubr.f32.gmra.mxu0 %v902
      %v970 = vpop.f32.mrf.mxu0
      %v971 = vadd.f32 0.0, %v970
      %v972 = vpop.f32.mrf.mxu0
      %973 = vdwg.mxu0
      %v974 = vadd.f32 %v432, %v971
      %v975 = vtanh.pop %v974
      %976 = vst [vmem:[#allocation2 + $0x30] sm:$0xff] %v975
      %977 = vmatprep.subr.mxu0 0.0
      %978 = vmatpush1.msra.mxu0 %v465
      %979 = vmatprep.subr.mxu0 0.0
      %980 = vmatpush1.msra.mxu0 %v464
      %981 = vmatprep.subr.mxu0 0.0
      %982 = vmatpush1.msra.mxu0 %v463
      %983 = vmatprep.subr.mxu0 0.0
      %984 = vmatpush1.msra.mxu0 %v462
      %985 = vmatprep.subr.mxu0 0.0
      %986 = vmatpush1.msra.mxu0 %v461
      %987 = vmatprep.subr.mxu0 0.0
      %988 = vmatpush1.msra.mxu0 %v460
      %989 = vmatprep.subr.mxu0 0.0
      %990 = vmatpush1.msra.mxu0 %v459
      %991 = vmatprep.subr.mxu0 0.0
      %992 = vmatpush1.msra.mxu0 %v458
      %993 = vmatprep.subr.mxu0 0.0
      %994 = vmatpush1.msra.mxu0 %v457
      %995 = vmatprep.subr.mxu0 0.0
      %996 = vmatpush1.msra.mxu0 %v456
      %997 = vmatprep.subr.mxu0 0.0
      %998 = vmatpush1.msra.mxu0 %v455
      %999 = vmatprep.subr.mxu0 0.0
      %1000 = vmatpush1.msra.mxu0 %v454
      %1001 = vmatprep.subr.mxu0 0.0
      %1002 = vmatpush1.msra.mxu0 %v453
      %1003 = vmatprep.subr.mxu0 0.0
      %1004 = vmatpush1.msra.mxu0 %v452
      %1005 = vmatprep.subr.mxu0 0.0
      %1006 = vmatpush1.msra.mxu0 %v451
      %1007 = vmatprep.subr.mxu0 0.0
      %1008 = vmatpush1.msra.mxu0 %v450
      %1009 = vmatprep.subr.mxu0 0.0
      %1010 = vmatpush2.msra.mxu0 0.0
      %1011 = vmatprep.subr.mxu0 0.0
      %1012 = vmatpush2.msra.mxu0 0.0
      %1013 = vmatprep.subr.mxu0 0.0
      %1014 = vmatpush2.msra.mxu0 0.0
      %1015 = vmatprep.subr.mxu0 0.0
      %1016 = vmatpush2.msra.mxu0 0.0
      %1017 = vmatprep.subr.mxu0 0.0
      %1018 = vmatpush2.msra.mxu0 0.0
      %1019 = vmatprep.subr.mxu0 0.0
      %1020 = vmatpush2.msra.mxu0 0.0
      %1021 = vmatprep.subr.mxu0 0.0
      %1022 = vmatpush2.msra.mxu0 0.0
      %1023 = vmatprep.subr.mxu0 0.0
      %1024 = vmatpush2.msra.mxu0 0.0
      %1025 = vmatprep.subr.mxu0 0.0
      %1026 = vmatpush2.msra.mxu0 0.0
      %1027 = vmatprep.subr.mxu0 0.0
      %1028 = vmatpush2.msra.mxu0 0.0
      %1029 = vmatprep.subr.mxu0 0.0
      %1030 = vmatpush2.msra.mxu0 0.0
      %1031 = vmatprep.subr.mxu0 0.0
      %1032 = vmatpush2.msra.mxu0 0.0
      %1033 = vmatprep.subr.mxu0 0.0
      %1034 = vmatpush2.msra.mxu0 0.0
      %1035 = vmatprep.subr.mxu0 0.0
      %1036 = vmatpush2.msra.mxu0 0.0
      %1037 = vmatprep.subr.mxu0 0.0
      %1038 = vmatpush2.msra.mxu0 0.0
      %1039 = vmatprep.subr.mxu0 0.0
      %1040 = vmatpush2.msra.mxu0 0.0
      %1041 = vmatprep.mubr.f32.mxu0 0.0
      %1042 = vmatmul.mubr.f32.gmra.mxu0 %v975
      %v1043 = vpop.f32.mrf.mxu0
      %v1044 = vadd.f32 0.0, %v1043
      %v1045 = vpop.f32.mrf.mxu0
      %1046 = vdwg.mxu0
      %v1047 = vadd.f32 %v437, %v1044
      %v1048 = vtanh.pop %v1047
      %1049 = vst [vmem:[#allocation2 + $0x38] sm:$0xff] %v1048
      %1050 = vmatprep.subr.mxu0 0.0
      %1051 = vmatpush1.msra.mxu0 %v465
      %1052 = vmatprep.subr.mxu0 0.0
      %1053 = vmatpush1.msra.mxu0 %v464
      %1054 = vmatprep.subr.mxu0 0.0
      %1055 = vmatpush1.msra.mxu0 %v463
      %1056 = vmatprep.subr.mxu0 0.0
      %1057 = vmatpush1.msra.mxu0 %v462
      %1058 = vmatprep.subr.mxu0 0.0
      %1059 = vmatpush1.msra.mxu0 %v461
      %1060 = vmatprep.subr.mxu0 0.0
      %1061 = vmatpush1.msra.mxu0 %v460
      %1062 = vmatprep.subr.mxu0 0.0
      %1063 = vmatpush1.msra.mxu0 %v459
      %1064 = vmatprep.subr.mxu0 0.0
      %1065 = vmatpush1.msra.mxu0 %v458
      %1066 = vmatprep.subr.mxu0 0.0
      %1067 = vmatpush1.msra.mxu0 %v457
      %1068 = vmatprep.subr.mxu0 0.0
      %1069 = vmatpush1.msra.mxu0 %v456
      %1070 = vmatprep.subr.mxu0 0.0
      %1071 = vmatpush1.msra.mxu0 %v455
      %1072 = vmatprep.subr.mxu0 0.0
      %1073 = vmatpush1.msra.mxu0 %v454
      %1074 = vmatprep.subr.mxu0 0.0
      %1075 = vmatpush1.msra.mxu0 %v453
      %1076 = vmatprep.subr.mxu0 0.0
      %1077 = vmatpush1.msra.mxu0 %v452
      %1078 = vmatprep.subr.mxu0 0.0
      %1079 = vmatpush1.msra.mxu0 %v451
      %1080 = vmatprep.subr.mxu0 0.0
      %1081 = vmatpush1.msra.mxu0 %v450
      %1082 = vmatprep.subr.mxu0 0.0
      %1083 = vmatpush2.msra.mxu0 0.0
      %1084 = vmatprep.subr.mxu0 0.0
      %1085 = vmatpush2.msra.mxu0 0.0
      %1086 = vmatprep.subr.mxu0 0.0
      %1087 = vmatpush2.msra.mxu0 0.0
      %1088 = vmatprep.subr.mxu0 0.0
      %1089 = vmatpush2.msra.mxu0 0.0
      %1090 = vmatprep.subr.mxu0 0.0
      %1091 = vmatpush2.msra.mxu0 0.0
      %1092 = vmatprep.subr.mxu0 0.0
      %1093 = vmatpush2.msra.mxu0 0.0
      %1094 = vmatprep.subr.mxu0 0.0
      %1095 = vmatpush2.msra.mxu0 0.0
      %1096 = vmatprep.subr.mxu0 0.0
      %1097 = vmatpush2.msra.mxu0 0.0
      %1098 = vmatprep.subr.mxu0 0.0
      %1099 = vmatpush2.msra.mxu0 0.0
      %1100 = vmatprep.subr.mxu0 0.0
      %1101 = vmatpush2.msra.mxu0 0.0
      %1102 = vmatprep.subr.mxu0 0.0
      %1103 = vmatpush2.msra.mxu0 0.0
      %1104 = vmatprep.subr.mxu0 0.0
      %1105 = vmatpush2.msra.mxu0 0.0
      %1106 = vmatprep.subr.mxu0 0.0
      %1107 = vmatpush2.msra.mxu0 0.0
      %1108 = vmatprep.subr.mxu0 0.0
      %1109 = vmatpush2.msra.mxu0 0.0
      %1110 = vmatprep.subr.mxu0 0.0
      %1111 = vmatpush2.msra.mxu0 0.0
      %1112 = vmatprep.subr.mxu0 0.0
      %1113 = vmatpush2.msra.mxu0 0.0
      %1114 = vmatprep.mubr.f32.mxu0 0.0
      %1115 = vmatmul.mubr.f32.gmra.mxu0 %v1048
      %v1116 = vpop.f32.mrf.mxu0
      %v1117 = vadd.f32 0.0, %v1116
      %v1118 = vpop.f32.mrf.mxu0
      %1119 = vdwg.mxu0
      %v1120 = vadd.f32 %v442, %v1117
      %v1121 = vtanh.pop %v1120
      %1122 = vst [vmem:[#allocation2 + $0x40] sm:$0xff] %v1121
      %1123 = vmatprep.subr.mxu0 0.0
      %1124 = vmatpush1.msra.mxu0 %v465
      %1125 = vmatprep.subr.mxu0 0.0
      %1126 = vmatpush1.msra.mxu0 %v464
      %1127 = vmatprep.subr.mxu0 0.0
      %1128 = vmatpush1.msra.mxu0 %v463
      %1129 = vmatprep.subr.mxu0 0.0
      %1130 = vmatpush1.msra.mxu0 %v462
      %1131 = vmatprep.subr.mxu0 0.0
      %1132 = vmatpush1.msra.mxu0 %v461
      %1133 = vmatprep.subr.mxu0 0.0
      %1134 = vmatpush1.msra.mxu0 %v460
      %1135 = vmatprep.subr.mxu0 0.0
      %1136 = vmatpush1.msra.mxu0 %v459
      %1137 = vmatprep.subr.mxu0 0.0
      %1138 = vmatpush1.msra.mxu0 %v458
      %1139 = vmatprep.subr.mxu0 0.0
      %1140 = vmatpush1.msra.mxu0 %v457
      %1141 = vmatprep.subr.mxu0 0.0
      %1142 = vmatpush1.msra.mxu0 %v456
      %1143 = vmatprep.subr.mxu0 0.0
      %1144 = vmatpush1.msra.mxu0 %v455
      %1145 = vmatprep.subr.mxu0 0.0
      %1146 = vmatpush1.msra.mxu0 %v454
      %1147 = vmatprep.subr.mxu0 0.0
      %1148 = vmatpush1.msra.mxu0 %v453
      %1149 = vmatprep.subr.mxu0 0.0
      %1150 = vmatpush1.msra.mxu0 %v452
      %1151 = vmatprep.subr.mxu0 0.0
      %1152 = vmatpush1.msra.mxu0 %v451
      %1153 = vmatprep.subr.mxu0 0.0
      %1154 = vmatpush1.msra.mxu0 %v450
      %1155 = vmatprep.subr.mxu0 0.0
      %1156 = vmatpush2.msra.mxu0 0.0
      %1157 = vmatprep.subr.mxu0 0.0
      %1158 = vmatpush2.msra.mxu0 0.0
      %1159 = vmatprep.subr.mxu0 0.0
      %1160 = vmatpush2.msra.mxu0 0.0
      %1161 = vmatprep.subr.mxu0 0.0
      %1162 = vmatpush2.msra.mxu0 0.0
      %1163 = vmatprep.subr.mxu0 0.0
      %1164 = vmatpush2.msra.mxu0 0.0
      %1165 = vmatprep.subr.mxu0 0.0
      %1166 = vmatpush2.msra.mxu0 0.0
      %1167 = vmatprep.subr.mxu0 0.0
      %1168 = vmatpush2.msra.mxu0 0.0
      %1169 = vmatprep.subr.mxu0 0.0
      %1170 = vmatpush2.msra.mxu0 0.0
      %1171 = vmatprep.subr.mxu0 0.0
      %1172 = vmatpush2.msra.mxu0 0.0
      %1173 = vmatprep.subr.mxu0 0.0
      %1174 = vmatpush2.msra.mxu0 0.0
      %1175 = vmatprep.subr.mxu0 0.0
      %1176 = vmatpush2.msra.mxu0 0.0
      %1177 = vmatprep.subr.mxu0 0.0
      %1178 = vmatpush2.msra.mxu0 0.0
      %1179 = vmatprep.subr.mxu0 0.0
      %1180 = vmatpush2.msra.mxu0 0.0
      %1181 = vmatprep.subr.mxu0 0.0
      %1182 = vmatpush2.msra.mxu0 0.0
      %1183 = vmatprep.subr.mxu0 0.0
      %1184 = vmatpush2.msra.mxu0 0.0
      %1185 = vmatprep.subr.mxu0 0.0
      %1186 = vmatpush2.msra.mxu0 0.0
      %1187 = vmatprep.mubr.f32.mxu0 0.0
      %1188 = vmatmul.mubr.f32.gmra.mxu0 %v1121
      %v1189 = vpop.f32.mrf.mxu0
      %v1190 = vadd.f32 0.0, %v1189
      %v1191 = vpop.f32.mrf.mxu0
      %1192 = vdwg.mxu0
      %v1193 = vadd.f32 %v447, %v1190
      %v1194 = vtanh.pop %v1193
      %1195 = vst [vmem:[#allocation2 + $0x48] sm:$0xff] %v1194
    $region57: #{tpu_custom_call.1} parent=1 // pred_fallthru
      _
    %v1196 = vld [vmem:[#allocation2] sm:$0xff]
    %v1197 = vld [vmem:[#allocation2 + $0x8] sm:$0xff]
    %v1198 = vld [vmem:[#allocation2 + $0x10] sm:$0xff]
    %v1199 = vld [vmem:[#allocation2 + $0x18] sm:$0xff]
    %v1200 = vld [vmem:[#allocation2 + $0x20] sm:$0xff]
    %v1201 = vld [vmem:[#allocation2 + $0x28] sm:$0xff]
    %v1202 = vld [vmem:[#allocation2 + $0x30] sm:$0xff]
    %v1203 = vld [vmem:[#allocation2 + $0x38] sm:$0xff]
    %v1204 = vld [vmem:[#allocation2 + $0x40] sm:$0xff]
    %v1205 = vld [vmem:[#allocation2 + $0x48] sm:$0xff]
    %v1206 = vld [vmem:[#allocation11] sm:$0xff]
    %v1207 = vld [vmem:[#allocation11 + $0x8] sm:$0xff]
    %v1208 = vld [vmem:[#allocation11 + $0x10] sm:$0xff]
    %v1209 = vld [vmem:[#allocation11 + $0x18] sm:$0xff]
    %v1210 = vld [vmem:[#allocation11 + $0x20] sm:$0xff]
    %v1211 = vld [vmem:[#allocation11 + $0x28] sm:$0xff]
    %v1212 = vld [vmem:[#allocation11 + $0x30] sm:$0xff]
    %v1213 = vld [vmem:[#allocation11 + $0x38] sm:$0xff]
    %v1214 = vld [vmem:[#allocation11 + $0x40] sm:$0xff]
    %v1215 = vld [vmem:[#allocation11 + $0x48] sm:$0xff]
    %v1216 = vld [vmem:[#allocation11 + $0x50] sm:$0xff]
    %v1217 = vld [vmem:[#allocation11 + $0x58] sm:$0xff]
    %v1218 = vld [vmem:[#allocation11 + $0x60] sm:$0xff]
    %v1219 = vld [vmem:[#allocation11 + $0x68] sm:$0xff]
    %v1220 = vld [vmem:[#allocation11 + $0x70] sm:$0xff]
    %v1221 = vld [vmem:[#allocation11 + $0x78] sm:$0xff]
    %v1222 = vld [vmem:[#allocation11 + $0x80] sm:$0xff]
    %v1223 = vld [vmem:[#allocation11 + $0x88] sm:$0xff]
    %v1224 = vld [vmem:[#allocation11 + $0x90] sm:$0xff]
    %v1225 = vld [vmem:[#allocation11 + $0x98] sm:$0xff]
    %v1226 = vld [vmem:[#allocation11 + $0xa0] sm:$0xff]
    %v1227 = vld [vmem:[#allocation11 + $0xa8] sm:$0xff]
    %v1228 = vld [vmem:[#allocation11 + $0xb0] sm:$0xff]
    %v1229 = vld [vmem:[#allocation11 + $0xb8] sm:$0xff]
    %v1230 = vld [vmem:[#allocation11 + $0xc0] sm:$0xff]
    %v1231 = vld [vmem:[#allocation11 + $0xc8] sm:$0xff]
    %v1232 = vld [vmem:[#allocation11 + $0xd0] sm:$0xff]
    %v1233 = vld [vmem:[#allocation11 + $0xd8] sm:$0xff]
    %v1234 = vld [vmem:[#allocation11 + $0xe0] sm:$0xff]
    %v1235 = vld [vmem:[#allocation11 + $0xe8] sm:$0xff]
    %v1236 = vld [vmem:[#allocation11 + $0xf0] sm:$0xff]
    %v1237 = vld [vmem:[#allocation11 + $0xf8] sm:$0xff]
    %v1238 = vld [vmem:[#allocation11 + $0x100] sm:$0xff]
    %v1239 = vld [vmem:[#allocation11 + $0x108] sm:$0xff]
    %v1240 = vld [vmem:[#allocation11 + $0x110] sm:$0xff]
    %v1241 = vld [vmem:[#allocation11 + $0x118] sm:$0xff]
    %v1242 = vld [vmem:[#allocation11 + $0x120] sm:$0xff]
    %v1243 = vld [vmem:[#allocation11 + $0x128] sm:$0xff]
    %v1244 = vld [vmem:[#allocation11 + $0x130] sm:$0xff]
    %v1245 = vld [vmem:[#allocation11 + $0x138] sm:$0xff]
    %v1246 = vld [vmem:[#allocation11 + $0x140] sm:$0xff]
    %v1247 = vld [vmem:[#allocation11 + $0x148] sm:$0xff]
    %v1248 = vld [vmem:[#allocation11 + $0x150] sm:$0xff]
    %v1249 = vld [vmem:[#allocation11 + $0x158] sm:$0xff]
    %v1250 = vld [vmem:[#allocation11 + $0x160] sm:$0xff]
    %v1251 = vld [vmem:[#allocation11 + $0x168] sm:$0xff]
    %v1252 = vld [vmem:[#allocation11 + $0x170] sm:$0xff]
    %v1253 = vld [vmem:[#allocation11 + $0x178] sm:$0xff]
    %v1254 = vld [vmem:[#allocation11 + $0x180] sm:$0xff]
    %v1255 = vld [vmem:[#allocation11 + $0x188] sm:$0xff]
    %v1256 = vld [vmem:[#allocation11 + $0x190] sm:$0xff]
    %v1257 = vld [vmem:[#allocation11 + $0x198] sm:$0xff]
    %v1258 = vld [vmem:[#allocation11 + $0x1a0] sm:$0xff]
    %v1259 = vld [vmem:[#allocation11 + $0x1a8] sm:$0xff]
    %v1260 = vld [vmem:[#allocation11 + $0x1b0] sm:$0xff]
    %v1261 = vld [vmem:[#allocation11 + $0x1b8] sm:$0xff]
    %v1262 = vld [vmem:[#allocation11 + $0x1c0] sm:$0xff]
    %v1263 = vld [vmem:[#allocation11 + $0x1c8] sm:$0xff]
    %v1264 = vld [vmem:[#allocation11 + $0x1d0] sm:$0xff]
    %v1265 = vld [vmem:[#allocation11 + $0x1d8] sm:$0xff]
    %v1266 = vld [vmem:[#allocation11 + $0x1e0] sm:$0xff]
    %v1267 = vld [vmem:[#allocation11 + $0x1e8] sm:$0xff]
    %v1268 = vld [vmem:[#allocation11 + $0x1f0] sm:$0xff]
    %v1269 = vld [vmem:[#allocation11 + $0x1f8] sm:$0xff]
    %v1270 = vld [vmem:[#allocation11 + $0x200] sm:$0xff]
    %v1271 = vld [vmem:[#allocation11 + $0x208] sm:$0xff]
    %v1272 = vld [vmem:[#allocation11 + $0x210] sm:$0xff]
    %v1273 = vld [vmem:[#allocation11 + $0x218] sm:$0xff]
    %v1274 = vld [vmem:[#allocation11 + $0x220] sm:$0xff]
    %v1275 = vld [vmem:[#allocation11 + $0x228] sm:$0xff]
    %v1276 = vld [vmem:[#allocation11 + $0x230] sm:$0xff]
    %v1277 = vld [vmem:[#allocation11 + $0x238] sm:$0xff]
    %v1278 = vld [vmem:[#allocation11 + $0x240] sm:$0xff]
    %v1279 = vld [vmem:[#allocation11 + $0x248] sm:$0xff]
    %v1280 = vld [vmem:[#allocation11 + $0x250] sm:$0xff]
    %v1281 = vld [vmem:[#allocation11 + $0x258] sm:$0xff]
    %v1282 = vld [vmem:[#allocation11 + $0x260] sm:$0xff]
    %v1283 = vld [vmem:[#allocation11 + $0x268] sm:$0xff]
    %v1284 = vld [vmem:[#allocation11 + $0x270] sm:$0xff]
    %v1285 = vld [vmem:[#allocation11 + $0x278] sm:$0xff]
    %v1286 = vld [vmem:[#allocation11 + $0x280] sm:$0xff]
    %v1287 = vld [vmem:[#allocation11 + $0x288] sm:$0xff]
    %v1288 = vld [vmem:[#allocation11 + $0x290] sm:$0xff]
    %v1289 = vld [vmem:[#allocation11 + $0x298] sm:$0xff]
    %v1290 = vld [vmem:[#allocation11 + $0x2a0] sm:$0xff]
    %v1291 = vld [vmem:[#allocation11 + $0x2a8] sm:$0xff]
    %v1292 = vld [vmem:[#allocation11 + $0x2b0] sm:$0xff]
    %v1293 = vld [vmem:[#allocation11 + $0x2b8] sm:$0xff]
    %v1294 = vld [vmem:[#allocation11 + $0x2c0] sm:$0xff]
    %v1295 = vld [vmem:[#allocation11 + $0x2c8] sm:$0xff]
    %v1296 = vld [vmem:[#allocation11 + $0x2d0] sm:$0xff]
    %v1297 = vld [vmem:[#allocation11 + $0x2d8] sm:$0xff]
    %v1298 = vld [vmem:[#allocation11 + $0x2e0] sm:$0xff]
    %v1299 = vld [vmem:[#allocation11 + $0x2e8] sm:$0xff]
    %v1300 = vld [vmem:[#allocation11 + $0x2f0] sm:$0xff]
    %v1301 = vld [vmem:[#allocation11 + $0x2f8] sm:$0xff]
    %v1302 = vld [vmem:[#allocation11 + $0x300] sm:$0xff]
    %v1303 = vld [vmem:[#allocation11 + $0x308] sm:$0xff]
    %v1304 = vld [vmem:[#allocation11 + $0x310] sm:$0xff]
    %v1305 = vld [vmem:[#allocation11 + $0x318] sm:$0xff]
    %v1306 = vld [vmem:[#allocation11 + $0x320] sm:$0xff]
    %v1307 = vld [vmem:[#allocation11 + $0x328] sm:$0xff]
    %v1308 = vld [vmem:[#allocation11 + $0x330] sm:$0xff]
    %v1309 = vld [vmem:[#allocation11 + $0x338] sm:$0xff]
    %v1310 = vld [vmem:[#allocation11 + $0x340] sm:$0xff]
    %v1311 = vld [vmem:[#allocation11 + $0x348] sm:$0xff]
    %v1312 = vld [vmem:[#allocation11 + $0x350] sm:$0xff]
    %v1313 = vld [vmem:[#allocation11 + $0x358] sm:$0xff]
    %v1314 = vld [vmem:[#allocation11 + $0x360] sm:$0xff]
    %v1315 = vld [vmem:[#allocation11 + $0x368] sm:$0xff]
    %v1316 = vld [vmem:[#allocation11 + $0x370] sm:$0xff]
    %v1317 = vld [vmem:[#allocation11 + $0x378] sm:$0xff]
    %v1318 = vld [vmem:[#allocation11 + $0x380] sm:$0xff]
    %v1319 = vld [vmem:[#allocation11 + $0x388] sm:$0xff]
    %v1320 = vld [vmem:[#allocation11 + $0x390] sm:$0xff]
    %v1321 = vld [vmem:[#allocation11 + $0x398] sm:$0xff]
    %v1322 = vld [vmem:[#allocation11 + $0x3a0] sm:$0xff]
    %v1323 = vld [vmem:[#allocation11 + $0x3a8] sm:$0xff]
    %v1324 = vld [vmem:[#allocation11 + $0x3b0] sm:$0xff]
    %v1325 = vld [vmem:[#allocation11 + $0x3b8] sm:$0xff]
    %v1326 = vld [vmem:[#allocation11 + $0x3c0] sm:$0xff]
    %v1327 = vld [vmem:[#allocation11 + $0x3c8] sm:$0xff]
    %v1328 = vld [vmem:[#allocation11 + $0x3d0] sm:$0xff]
    %v1329 = vld [vmem:[#allocation11 + $0x3d8] sm:$0xff]
    %v1330 = vld [vmem:[#allocation11 + $0x3e0] sm:$0xff]
    %v1331 = vld [vmem:[#allocation11 + $0x3e8] sm:$0xff]
    %v1332 = vld [vmem:[#allocation11 + $0x3f0] sm:$0xff]
    %v1333 = vld [vmem:[#allocation11 + $0x3f8] sm:$0xff]
    %v1334 = vld [vmem:[#allocation11 + $0x400] sm:$0xff]
    %v1335 = vld [vmem:[#allocation11 + $0x408] sm:$0xff]
    %v1336 = vld [vmem:[#allocation11 + $0x410] sm:$0xff]
    %v1337 = vld [vmem:[#allocation11 + $0x418] sm:$0xff]
    %v1338 = vld [vmem:[#allocation11 + $0x420] sm:$0xff]
    %v1339 = vld [vmem:[#allocation11 + $0x428] sm:$0xff]
    %v1340 = vld [vmem:[#allocation11 + $0x430] sm:$0xff]
    %v1341 = vld [vmem:[#allocation11 + $0x438] sm:$0xff]
    %v1342 = vld [vmem:[#allocation11 + $0x440] sm:$0xff]
    %v1343 = vld [vmem:[#allocation11 + $0x448] sm:$0xff]
    %v1344 = vld [vmem:[#allocation11 + $0x450] sm:$0xff]
    %v1345 = vld [vmem:[#allocation11 + $0x458] sm:$0xff]
    %v1346 = vld [vmem:[#allocation11 + $0x460] sm:$0xff]
    %v1347 = vld [vmem:[#allocation11 + $0x468] sm:$0xff]
    %v1348 = vld [vmem:[#allocation11 + $0x470] sm:$0xff]
    %v1349 = vld [vmem:[#allocation11 + $0x478] sm:$0xff]
    %v1350 = vld [vmem:[#allocation11 + $0x480] sm:$0xff]
    %v1351 = vld [vmem:[#allocation11 + $0x488] sm:$0xff]
    %v1352 = vld [vmem:[#allocation11 + $0x490] sm:$0xff]
    %v1353 = vld [vmem:[#allocation11 + $0x498] sm:$0xff]
    %v1354 = vld [vmem:[#allocation11 + $0x4a0] sm:$0xff]
    %v1355 = vld [vmem:[#allocation11 + $0x4a8] sm:$0xff]
    %v1356 = vld [vmem:[#allocation11 + $0x4b0] sm:$0xff]
    %v1357 = vld [vmem:[#allocation11 + $0x4b8] sm:$0xff]
    %v1358 = vld [vmem:[#allocation11 + $0x4c0] sm:$0xff]
    %v1359 = vld [vmem:[#allocation11 + $0x4c8] sm:$0xff]
    %v1360 = vld [vmem:[#allocation11 + $0x4d0] sm:$0xff]
    %v1361 = vld [vmem:[#allocation11 + $0x4d8] sm:$0xff]
    %v1362 = vld [vmem:[#allocation11 + $0x4e0] sm:$0xff]
    %v1363 = vld [vmem:[#allocation11 + $0x4e8] sm:$0xff]
    %v1364 = vld [vmem:[#allocation11 + $0x4f0] sm:$0xff]
    %v1365 = vld [vmem:[#allocation11 + $0x4f8] sm:$0xff]
    %v1366 = vld [vmem:[#allocation11 + $0x500] sm:$0xff]
    %v1367 = vld [vmem:[#allocation11 + $0x508] sm:$0xff]
    %v1368 = vld [vmem:[#allocation11 + $0x510] sm:$0xff]
    %v1369 = vld [vmem:[#allocation11 + $0x518] sm:$0xff]
    %v1370 = vld [vmem:[#allocation11 + $0x520] sm:$0xff]
    %v1371 = vld [vmem:[#allocation11 + $0x528] sm:$0xff]
    %v1372 = vld [vmem:[#allocation11 + $0x530] sm:$0xff]
    %v1373 = vld [vmem:[#allocation11 + $0x538] sm:$0xff]
    %v1374 = vld [vmem:[#allocation11 + $0x540] sm:$0xff]
    %v1375 = vld [vmem:[#allocation11 + $0x548] sm:$0xff]
    %v1376 = vld [vmem:[#allocation11 + $0x550] sm:$0xff]
    %v1377 = vld [vmem:[#allocation11 + $0x558] sm:$0xff]
    %v1378 = vld [vmem:[#allocation11 + $0x560] sm:$0xff]
    %v1379 = vld [vmem:[#allocation11 + $0x568] sm:$0xff]
    %v1380 = vld [vmem:[#allocation11 + $0x570] sm:$0xff]
    %v1381 = vld [vmem:[#allocation11 + $0x578] sm:$0xff]
    %v1382 = vld [vmem:[#allocation11 + $0x580] sm:$0xff]
    %v1383 = vld [vmem:[#allocation11 + $0x588] sm:$0xff]
    %v1384 = vld [vmem:[#allocation11 + $0x590] sm:$0xff]
    %v1385 = vld [vmem:[#allocation11 + $0x598] sm:$0xff]
    %v1386 = vld [vmem:[#allocation11 + $0x5a0] sm:$0xff]
    %v1387 = vld [vmem:[#allocation11 + $0x5a8] sm:$0xff]
    %v1388 = vld [vmem:[#allocation11 + $0x5b0] sm:$0xff]
    %v1389 = vld [vmem:[#allocation11 + $0x5b8] sm:$0xff]
    %v1390 = vld [vmem:[#allocation11 + $0x5c0] sm:$0xff]
    %v1391 = vld [vmem:[#allocation11 + $0x5c8] sm:$0xff]
    %v1392 = vld [vmem:[#allocation11 + $0x5d0] sm:$0xff]
    %v1393 = vld [vmem:[#allocation11 + $0x5d8] sm:$0xff]
    %v1394 = vld [vmem:[#allocation11 + $0x5e0] sm:$0xff]
    %v1395 = vld [vmem:[#allocation11 + $0x5e8] sm:$0xff]
    %v1396 = vld [vmem:[#allocation11 + $0x5f0] sm:$0xff]
    %v1397 = vld [vmem:[#allocation11 + $0x5f8] sm:$0xff]
    %v1398 = vld [vmem:[#allocation11 + $0x600] sm:$0xff]
    %v1399 = vld [vmem:[#allocation11 + $0x608] sm:$0xff]
    %v1400 = vld [vmem:[#allocation11 + $0x610] sm:$0xff]
    %v1401 = vld [vmem:[#allocation11 + $0x618] sm:$0xff]
    %v1402 = vld [vmem:[#allocation11 + $0x620] sm:$0xff]
    %v1403 = vld [vmem:[#allocation11 + $0x628] sm:$0xff]
    %v1404 = vld [vmem:[#allocation11 + $0x630] sm:$0xff]
    %v1405 = vld [vmem:[#allocation11 + $0x638] sm:$0xff]
    %v1406 = vld [vmem:[#allocation11 + $0x640] sm:$0xff]
    %v1407 = vld [vmem:[#allocation11 + $0x648] sm:$0xff]
    %v1408 = vld [vmem:[#allocation11 + $0x650] sm:$0xff]
    %v1409 = vld [vmem:[#allocation11 + $0x658] sm:$0xff]
    %v1410 = vld [vmem:[#allocation11 + $0x660] sm:$0xff]
    %v1411 = vld [vmem:[#allocation11 + $0x668] sm:$0xff]
    %v1412 = vld [vmem:[#allocation11 + $0x670] sm:$0xff]
    %v1413 = vld [vmem:[#allocation11 + $0x678] sm:$0xff]
    %v1414 = vld [vmem:[#allocation11 + $0x680] sm:$0xff]
    %v1415 = vld [vmem:[#allocation11 + $0x688] sm:$0xff]
    %v1416 = vld [vmem:[#allocation11 + $0x690] sm:$0xff]
    %v1417 = vld [vmem:[#allocation11 + $0x698] sm:$0xff]
    %v1418 = vld [vmem:[#allocation11 + $0x6a0] sm:$0xff]
    %v1419 = vld [vmem:[#allocation11 + $0x6a8] sm:$0xff]
    %v1420 = vld [vmem:[#allocation11 + $0x6b0] sm:$0xff]
    %v1421 = vld [vmem:[#allocation11 + $0x6b8] sm:$0xff]
    %v1422 = vld [vmem:[#allocation11 + $0x6c0] sm:$0xff]
    %v1423 = vld [vmem:[#allocation11 + $0x6c8] sm:$0xff]
    %v1424 = vld [vmem:[#allocation11 + $0x6d0] sm:$0xff]
    %v1425 = vld [vmem:[#allocation11 + $0x6d8] sm:$0xff]
    %v1426 = vld [vmem:[#allocation11 + $0x6e0] sm:$0xff]
    %v1427 = vld [vmem:[#allocation11 + $0x6e8] sm:$0xff]
    %v1428 = vld [vmem:[#allocation11 + $0x6f0] sm:$0xff]
    %v1429 = vld [vmem:[#allocation11 + $0x6f8] sm:$0xff]
    %v1430 = vld [vmem:[#allocation11 + $0x700] sm:$0xff]
    %v1431 = vld [vmem:[#allocation11 + $0x708] sm:$0xff]
    %v1432 = vld [vmem:[#allocation11 + $0x710] sm:$0xff]
    %v1433 = vld [vmem:[#allocation11 + $0x718] sm:$0xff]
    %v1434 = vld [vmem:[#allocation11 + $0x720] sm:$0xff]
    %v1435 = vld [vmem:[#allocation11 + $0x728] sm:$0xff]
    %v1436 = vld [vmem:[#allocation11 + $0x730] sm:$0xff]
    %v1437 = vld [vmem:[#allocation11 + $0x738] sm:$0xff]
    %v1438 = vld [vmem:[#allocation11 + $0x740] sm:$0xff]
    %v1439 = vld [vmem:[#allocation11 + $0x748] sm:$0xff]
    %v1440 = vld [vmem:[#allocation11 + $0x750] sm:$0xff]
    %v1441 = vld [vmem:[#allocation11 + $0x758] sm:$0xff]
    %v1442 = vld [vmem:[#allocation11 + $0x760] sm:$0xff]
    %v1443 = vld [vmem:[#allocation11 + $0x768] sm:$0xff]
    %v1444 = vld [vmem:[#allocation11 + $0x770] sm:$0xff]
    %v1445 = vld [vmem:[#allocation11 + $0x778] sm:$0xff]
    %v1446 = vld [vmem:[#allocation11 + $0x780] sm:$0xff]
    %v1447 = vld [vmem:[#allocation11 + $0x788] sm:$0xff]
    %v1448 = vld [vmem:[#allocation11 + $0x790] sm:$0xff]
    %v1449 = vld [vmem:[#allocation11 + $0x798] sm:$0xff]
    %v1450 = vld [vmem:[#allocation11 + $0x7a0] sm:$0xff]
    %v1451 = vld [vmem:[#allocation11 + $0x7a8] sm:$0xff]
    %v1452 = vld [vmem:[#allocation11 + $0x7b0] sm:$0xff]
    %v1453 = vld [vmem:[#allocation11 + $0x7b8] sm:$0xff]
    %v1454 = vld [vmem:[#allocation11 + $0x7c0] sm:$0xff]
    %v1455 = vld [vmem:[#allocation11 + $0x7c8] sm:$0xff]
    %v1456 = vld [vmem:[#allocation11 + $0x7d0] sm:$0xff]
    %v1457 = vld [vmem:[#allocation11 + $0x7d8] sm:$0xff]
    %v1458 = vld [vmem:[#allocation11 + $0x7e0] sm:$0xff]
    %v1459 = vld [vmem:[#allocation11 + $0x7e8] sm:$0xff]
    %v1460 = vld [vmem:[#allocation11 + $0x7f0] sm:$0xff]
    %v1461 = vld [vmem:[#allocation11 + $0x7f8] sm:$0xff]
    %v1462 = vld [vmem:[#allocation11 + $0x800] sm:$0xff]
    %v1463 = vld [vmem:[#allocation11 + $0x808] sm:$0xff]
    %v1464 = vld [vmem:[#allocation11 + $0x810] sm:$0xff]
    %v1465 = vld [vmem:[#allocation11 + $0x818] sm:$0xff]
    %v1466 = vld [vmem:[#allocation11 + $0x820] sm:$0xff]
    %v1467 = vld [vmem:[#allocation11 + $0x828] sm:$0xff]
    %v1468 = vld [vmem:[#allocation11 + $0x830] sm:$0xff]
    %v1469 = vld [vmem:[#allocation11 + $0x838] sm:$0xff]
    %v1470 = vld [vmem:[#allocation11 + $0x840] sm:$0xff]
    %v1471 = vld [vmem:[#allocation11 + $0x848] sm:$0xff]
    %v1472 = vld [vmem:[#allocation11 + $0x850] sm:$0xff]
    %v1473 = vld [vmem:[#allocation11 + $0x858] sm:$0xff]
    %v1474 = vld [vmem:[#allocation11 + $0x860] sm:$0xff]
    %v1475 = vld [vmem:[#allocation11 + $0x868] sm:$0xff]
    %v1476 = vld [vmem:[#allocation11 + $0x870] sm:$0xff]
    %v1477 = vld [vmem:[#allocation11 + $0x878] sm:$0xff]
    %v1478 = vld [vmem:[#allocation11 + $0x880] sm:$0xff]
    %v1479 = vld [vmem:[#allocation11 + $0x888] sm:$0xff]
    %v1480 = vld [vmem:[#allocation11 + $0x890] sm:$0xff]
    %v1481 = vld [vmem:[#allocation11 + $0x898] sm:$0xff]
    %v1482 = vld [vmem:[#allocation11 + $0x8a0] sm:$0xff]
    %v1483 = vld [vmem:[#allocation11 + $0x8a8] sm:$0xff]
    %v1484 = vld [vmem:[#allocation11 + $0x8b0] sm:$0xff]
    %v1485 = vld [vmem:[#allocation11 + $0x8b8] sm:$0xff]
    %v1486 = vld [vmem:[#allocation11 + $0x8c0] sm:$0xff]
    %v1487 = vld [vmem:[#allocation11 + $0x8c8] sm:$0xff]
    %v1488 = vld [vmem:[#allocation11 + $0x8d0] sm:$0xff]
    %v1489 = vld [vmem:[#allocation11 + $0x8d8] sm:$0xff]
    %v1490 = vld [vmem:[#allocation11 + $0x8e0] sm:$0xff]
    %v1491 = vld [vmem:[#allocation11 + $0x8e8] sm:$0xff]
    %v1492 = vld [vmem:[#allocation11 + $0x8f0] sm:$0xff]
    %v1493 = vld [vmem:[#allocation11 + $0x8f8] sm:$0xff]
    %v1494 = vld [vmem:[#allocation11 + $0x900] sm:$0xff]
    %v1495 = vld [vmem:[#allocation11 + $0x908] sm:$0xff]
    %v1496 = vld [vmem:[#allocation11 + $0x910] sm:$0xff]
    %v1497 = vld [vmem:[#allocation11 + $0x918] sm:$0xff]
    %v1498 = vld [vmem:[#allocation11 + $0x920] sm:$0xff]
    %v1499 = vld [vmem:[#allocation11 + $0x928] sm:$0xff]
    %v1500 = vld [vmem:[#allocation11 + $0x930] sm:$0xff]
    %v1501 = vld [vmem:[#allocation11 + $0x938] sm:$0xff]
    %v1502 = vld [vmem:[#allocation11 + $0x940] sm:$0xff]
    %v1503 = vld [vmem:[#allocation11 + $0x948] sm:$0xff]
    %v1504 = vld [vmem:[#allocation11 + $0x950] sm:$0xff]
    %v1505 = vld [vmem:[#allocation11 + $0x958] sm:$0xff]
    %v1506 = vld [vmem:[#allocation11 + $0x960] sm:$0xff]
    %v1507 = vld [vmem:[#allocation11 + $0x968] sm:$0xff]
    %v1508 = vld [vmem:[#allocation11 + $0x970] sm:$0xff]
    %v1509 = vld [vmem:[#allocation11 + $0x978] sm:$0xff]
    %v1510 = vld [vmem:[#allocation11 + $0x980] sm:$0xff]
    %v1511 = vld [vmem:[#allocation11 + $0x988] sm:$0xff]
    %v1512 = vld [vmem:[#allocation11 + $0x990] sm:$0xff]
    %v1513 = vld [vmem:[#allocation11 + $0x998] sm:$0xff]
    %v1514 = vld [vmem:[#allocation11 + $0x9a0] sm:$0xff]
    %v1515 = vld [vmem:[#allocation11 + $0x9a8] sm:$0xff]
    %v1516 = vld [vmem:[#allocation11 + $0x9b0] sm:$0xff]
    %v1517 = vld [vmem:[#allocation11 + $0x9b8] sm:$0xff]
    %v1518 = vld [vmem:[#allocation11 + $0x9c0] sm:$0xff]
    %v1519 = vld [vmem:[#allocation11 + $0x9c8] sm:$0xff]
    %v1520 = vld [vmem:[#allocation11 + $0x9d0] sm:$0xff]
    %v1521 = vld [vmem:[#allocation11 + $0x9d8] sm:$0xff]
    %v1522 = vld [vmem:[#allocation11 + $0x9e0] sm:$0xff]
    %v1523 = vld [vmem:[#allocation11 + $0x9e8] sm:$0xff]
    %v1524 = vld [vmem:[#allocation11 + $0x9f0] sm:$0xff]
    %v1525 = vld [vmem:[#allocation11 + $0x9f8] sm:$0xff]
    %v1526 = vld [vmem:[#allocation12] sm:$0x3]
    %v1528 = vlaneseq
    %v1529 = vshrl.u32 %v1528, 7
    %v1530 = vsub.s32 0, %v1529
    %v1531 = vrot.slane %v1526, %v1530
    %v1532 = vlaneseq
    %v1533 = vshrl.u32 %v1532, 7
    %v1534 = vsub.s32 1, %v1533
    %v1535 = vrot.slane %v1526, %v1534
    %1538 = vmatprep.subr.mxu0 %v1237
    %1539 = vmatpush1.msra.mxu0 %v1236
    %1540 = vmatprep.subr.mxu0 %v1235
    %1541 = vmatpush1.msra.mxu0 %v1234
    %1542 = vmatprep.subr.mxu0 %v1233
    %1543 = vmatpush1.msra.mxu0 %v1232
    %1544 = vmatprep.subr.mxu0 %v1231
    %1545 = vmatpush1.msra.mxu0 %v1230
    %1546 = vmatprep.subr.mxu0 %v1229
    %1547 = vmatpush1.msra.mxu0 %v1228
    %1548 = vmatprep.subr.mxu0 %v1227
    %1549 = vmatpush1.msra.mxu0 %v1226
    %1550 = vmatprep.subr.mxu0 %v1225
    %1551 = vmatpush1.msra.mxu0 %v1224
    %1552 = vmatprep.subr.mxu0 %v1223
    %1553 = vmatpush1.msra.mxu0 %v1222
    %1554 = vmatprep.subr.mxu0 %v1221
    %1555 = vmatpush1.msra.mxu0 %v1220
    %1556 = vmatprep.subr.mxu0 %v1219
    %1557 = vmatpush1.msra.mxu0 %v1218
    %1558 = vmatprep.subr.mxu0 %v1217
    %1559 = vmatpush1.msra.mxu0 %v1216
    %1560 = vmatprep.subr.mxu0 %v1215
    %1561 = vmatpush1.msra.mxu0 %v1214
    %1562 = vmatprep.subr.mxu0 %v1213
    %1563 = vmatpush1.msra.mxu0 %v1212
    %1564 = vmatprep.subr.mxu0 %v1211
    %1565 = vmatpush1.msra.mxu0 %v1210
    %1566 = vmatprep.subr.mxu0 %v1209
    %1567 = vmatpush1.msra.mxu0 %v1208
    %1568 = vmatprep.subr.mxu0 %v1207
    %1569 = vmatpush1.msra.mxu0 %v1206
    %1570 = vmatprep.subr.mxu0 %v1269
    %1571 = vmatpush2.msra.mxu0 %v1268
    %1572 = vmatprep.subr.mxu0 %v1267
    %1573 = vmatpush2.msra.mxu0 %v1266
    %1574 = vmatprep.subr.mxu0 %v1265
    %1575 = vmatpush2.msra.mxu0 %v1264
    %1576 = vmatprep.subr.mxu0 %v1263
    %1577 = vmatpush2.msra.mxu0 %v1262
    %1578 = vmatprep.subr.mxu0 %v1261
    %1579 = vmatpush2.msra.mxu0 %v1260
    %1580 = vmatprep.subr.mxu0 %v1259
    %1581 = vmatpush2.msra.mxu0 %v1258
    %1582 = vmatprep.subr.mxu0 %v1257
    %1583 = vmatpush2.msra.mxu0 %v1256
    %1584 = vmatprep.subr.mxu0 %v1255
    %1585 = vmatpush2.msra.mxu0 %v1254
    %1586 = vmatprep.subr.mxu0 %v1253
    %1587 = vmatpush2.msra.mxu0 %v1252
    %1588 = vmatprep.subr.mxu0 %v1251
    %1589 = vmatpush2.msra.mxu0 %v1250
    %1590 = vmatprep.subr.mxu0 %v1249
    %1591 = vmatpush2.msra.mxu0 %v1248
    %1592 = vmatprep.subr.mxu0 %v1247
    %1593 = vmatpush2.msra.mxu0 %v1246
    %1594 = vmatprep.subr.mxu0 %v1245
    %1595 = vmatpush2.msra.mxu0 %v1244
    %1596 = vmatprep.subr.mxu0 %v1243
    %1597 = vmatpush2.msra.mxu0 %v1242
    %1598 = vmatprep.subr.mxu0 %v1241
    %1599 = vmatpush2.msra.mxu0 %v1240
    %1600 = vmatprep.subr.mxu0 %v1239
    %1601 = vmatpush2.msra.mxu0 %v1238
    %1602 = vmatprep.mubr.f32.mxu0 %v1197
    %1603 = vmatmul.mubr.f32.gmra.mxu0 %v1196
    %v1604 = vpop.f32.mrf.mxu0
    %v1605 = vadd.f32 %v1531, %v1604
    %v1606 = vpop.f32.mrf.mxu0
    %v1607 = vadd.f32 %v1535, %v1606
    %1608 = vdwg.mxu0
    %1609 = vmatprep.subr.mxu0 %v1301
    %1610 = vmatpush1.msra.mxu0 %v1300
    %1611 = vmatprep.subr.mxu0 %v1299
    %1612 = vmatpush1.msra.mxu0 %v1298
    %1613 = vmatprep.subr.mxu0 %v1297
    %1614 = vmatpush1.msra.mxu0 %v1296
    %1615 = vmatprep.subr.mxu0 %v1295
    %1616 = vmatpush1.msra.mxu0 %v1294
    %1617 = vmatprep.subr.mxu0 %v1293
    %1618 = vmatpush1.msra.mxu0 %v1292
    %1619 = vmatprep.subr.mxu0 %v1291
    %1620 = vmatpush1.msra.mxu0 %v1290
    %1621 = vmatprep.subr.mxu0 %v1289
    %1622 = vmatpush1.msra.mxu0 %v1288
    %1623 = vmatprep.subr.mxu0 %v1287
    %1624 = vmatpush1.msra.mxu0 %v1286
    %1625 = vmatprep.subr.mxu0 %v1285
    %1626 = vmatpush1.msra.mxu0 %v1284
    %1627 = vmatprep.subr.mxu0 %v1283
    %1628 = vmatpush1.msra.mxu0 %v1282
    %1629 = vmatprep.subr.mxu0 %v1281
    %1630 = vmatpush1.msra.mxu0 %v1280
    %1631 = vmatprep.subr.mxu0 %v1279
    %1632 = vmatpush1.msra.mxu0 %v1278
    %1633 = vmatprep.subr.mxu0 %v1277
    %1634 = vmatpush1.msra.mxu0 %v1276
    %1635 = vmatprep.subr.mxu0 %v1275
    %1636 = vmatpush1.msra.mxu0 %v1274
    %1637 = vmatprep.subr.mxu0 %v1273
    %1638 = vmatpush1.msra.mxu0 %v1272
    %1639 = vmatprep.subr.mxu0 %v1271
    %1640 = vmatpush1.msra.mxu0 %v1270
    %1641 = vmatprep.subr.mxu0 %v1333
    %1642 = vmatpush2.msra.mxu0 %v1332
    %1643 = vmatprep.subr.mxu0 %v1331
    %1644 = vmatpush2.msra.mxu0 %v1330
    %1645 = vmatprep.subr.mxu0 %v1329
    %1646 = vmatpush2.msra.mxu0 %v1328
    %1647 = vmatprep.subr.mxu0 %v1327
    %1648 = vmatpush2.msra.mxu0 %v1326
    %1649 = vmatprep.subr.mxu0 %v1325
    %1650 = vmatpush2.msra.mxu0 %v1324
    %1651 = vmatprep.subr.mxu0 %v1323
    %1652 = vmatpush2.msra.mxu0 %v1322
    %1653 = vmatprep.subr.mxu0 %v1321
    %1654 = vmatpush2.msra.mxu0 %v1320
    %1655 = vmatprep.subr.mxu0 %v1319
    %1656 = vmatpush2.msra.mxu0 %v1318
    %1657 = vmatprep.subr.mxu0 %v1317
    %1658 = vmatpush2.msra.mxu0 %v1316
    %1659 = vmatprep.subr.mxu0 %v1315
    %1660 = vmatpush2.msra.mxu0 %v1314
    %1661 = vmatprep.subr.mxu0 %v1313
    %1662 = vmatpush2.msra.mxu0 %v1312
    %1663 = vmatprep.subr.mxu0 %v1311
    %1664 = vmatpush2.msra.mxu0 %v1310
    %1665 = vmatprep.subr.mxu0 %v1309
    %1666 = vmatpush2.msra.mxu0 %v1308
    %1667 = vmatprep.subr.mxu0 %v1307
    %1668 = vmatpush2.msra.mxu0 %v1306
    %1669 = vmatprep.subr.mxu0 %v1305
    %1670 = vmatpush2.msra.mxu0 %v1304
    %1671 = vmatprep.subr.mxu0 %v1303
    %1672 = vmatpush2.msra.mxu0 %v1302
    %1673 = vmatprep.mubr.f32.mxu0 %v1199
    %1674 = vmatmul.mubr.f32.gmra.mxu0 %v1198
    %v1675 = vpop.f32.mrf.mxu0
    %v1676 = vadd.f32 %v1605, %v1675
    %v1677 = vpop.f32.mrf.mxu0
    %v1678 = vadd.f32 %v1607, %v1677
    %1679 = vdwg.mxu0
    %1680 = vmatprep.subr.mxu0 %v1365
    %1681 = vmatpush1.msra.mxu0 %v1364
    %1682 = vmatprep.subr.mxu0 %v1363
    %1683 = vmatpush1.msra.mxu0 %v1362
    %1684 = vmatprep.subr.mxu0 %v1361
    %1685 = vmatpush1.msra.mxu0 %v1360
    %1686 = vmatprep.subr.mxu0 %v1359
    %1687 = vmatpush1.msra.mxu0 %v1358
    %1688 = vmatprep.subr.mxu0 %v1357
    %1689 = vmatpush1.msra.mxu0 %v1356
    %1690 = vmatprep.subr.mxu0 %v1355
    %1691 = vmatpush1.msra.mxu0 %v1354
    %1692 = vmatprep.subr.mxu0 %v1353
    %1693 = vmatpush1.msra.mxu0 %v1352
    %1694 = vmatprep.subr.mxu0 %v1351
    %1695 = vmatpush1.msra.mxu0 %v1350
    %1696 = vmatprep.subr.mxu0 %v1349
    %1697 = vmatpush1.msra.mxu0 %v1348
    %1698 = vmatprep.subr.mxu0 %v1347
    %1699 = vmatpush1.msra.mxu0 %v1346
    %1700 = vmatprep.subr.mxu0 %v1345
    %1701 = vmatpush1.msra.mxu0 %v1344
    %1702 = vmatprep.subr.mxu0 %v1343
    %1703 = vmatpush1.msra.mxu0 %v1342
    %1704 = vmatprep.subr.mxu0 %v1341
    %1705 = vmatpush1.msra.mxu0 %v1340
    %1706 = vmatprep.subr.mxu0 %v1339
    %1707 = vmatpush1.msra.mxu0 %v1338
    %1708 = vmatprep.subr.mxu0 %v1337
    %1709 = vmatpush1.msra.mxu0 %v1336
    %1710 = vmatprep.subr.mxu0 %v1335
    %1711 = vmatpush1.msra.mxu0 %v1334
    %1712 = vmatprep.subr.mxu0 %v1397
    %1713 = vmatpush2.msra.mxu0 %v1396
    %1714 = vmatprep.subr.mxu0 %v1395
    %1715 = vmatpush2.msra.mxu0 %v1394
    %1716 = vmatprep.subr.mxu0 %v1393
    %1717 = vmatpush2.msra.mxu0 %v1392
    %1718 = vmatprep.subr.mxu0 %v1391
    %1719 = vmatpush2.msra.mxu0 %v1390
    %1720 = vmatprep.subr.mxu0 %v1389
    %1721 = vmatpush2.msra.mxu0 %v1388
    %1722 = vmatprep.subr.mxu0 %v1387
    %1723 = vmatpush2.msra.mxu0 %v1386
    %1724 = vmatprep.subr.mxu0 %v1385
    %1725 = vmatpush2.msra.mxu0 %v1384
    %1726 = vmatprep.subr.mxu0 %v1383
    %1727 = vmatpush2.msra.mxu0 %v1382
    %1728 = vmatprep.subr.mxu0 %v1381
    %1729 = vmatpush2.msra.mxu0 %v1380
    %1730 = vmatprep.subr.mxu0 %v1379
    %1731 = vmatpush2.msra.mxu0 %v1378
    %1732 = vmatprep.subr.mxu0 %v1377
    %1733 = vmatpush2.msra.mxu0 %v1376
    %1734 = vmatprep.subr.mxu0 %v1375
    %1735 = vmatpush2.msra.mxu0 %v1374
    %1736 = vmatprep.subr.mxu0 %v1373
    %1737 = vmatpush2.msra.mxu0 %v1372
    %1738 = vmatprep.subr.mxu0 %v1371
    %1739 = vmatpush2.msra.mxu0 %v1370
    %1740 = vmatprep.subr.mxu0 %v1369
    %1741 = vmatpush2.msra.mxu0 %v1368
    %1742 = vmatprep.subr.mxu0 %v1367
    %1743 = vmatpush2.msra.mxu0 %v1366
    %1744 = vmatprep.mubr.f32.mxu0 %v1201
    %1745 = vmatmul.mubr.f32.gmra.mxu0 %v1200
    %v1746 = vpop.f32.mrf.mxu0
    %v1747 = vadd.f32 %v1676, %v1746
    %v1748 = vpop.f32.mrf.mxu0
    %v1749 = vadd.f32 %v1678, %v1748
    %1750 = vdwg.mxu0
    %1751 = vmatprep.subr.mxu0 %v1429
    %1752 = vmatpush1.msra.mxu0 %v1428
    %1753 = vmatprep.subr.mxu0 %v1427
    %1754 = vmatpush1.msra.mxu0 %v1426
    %1755 = vmatprep.subr.mxu0 %v1425
    %1756 = vmatpush1.msra.mxu0 %v1424
    %1757 = vmatprep.subr.mxu0 %v1423
    %1758 = vmatpush1.msra.mxu0 %v1422
    %1759 = vmatprep.subr.mxu0 %v1421
    %1760 = vmatpush1.msra.mxu0 %v1420
    %1761 = vmatprep.subr.mxu0 %v1419
    %1762 = vmatpush1.msra.mxu0 %v1418
    %1763 = vmatprep.subr.mxu0 %v1417
    %1764 = vmatpush1.msra.mxu0 %v1416
    %1765 = vmatprep.subr.mxu0 %v1415
    %1766 = vmatpush1.msra.mxu0 %v1414
    %1767 = vmatprep.subr.mxu0 %v1413
    %1768 = vmatpush1.msra.mxu0 %v1412
    %1769 = vmatprep.subr.mxu0 %v1411
    %1770 = vmatpush1.msra.mxu0 %v1410
    %1771 = vmatprep.subr.mxu0 %v1409
    %1772 = vmatpush1.msra.mxu0 %v1408
    %1773 = vmatprep.subr.mxu0 %v1407
    %1774 = vmatpush1.msra.mxu0 %v1406
    %1775 = vmatprep.subr.mxu0 %v1405
    %1776 = vmatpush1.msra.mxu0 %v1404
    %1777 = vmatprep.subr.mxu0 %v1403
    %1778 = vmatpush1.msra.mxu0 %v1402
    %1779 = vmatprep.subr.mxu0 %v1401
    %1780 = vmatpush1.msra.mxu0 %v1400
    %1781 = vmatprep.subr.mxu0 %v1399
    %1782 = vmatpush1.msra.mxu0 %v1398
    %1783 = vmatprep.subr.mxu0 %v1461
    %1784 = vmatpush2.msra.mxu0 %v1460
    %1785 = vmatprep.subr.mxu0 %v1459
    %1786 = vmatpush2.msra.mxu0 %v1458
    %1787 = vmatprep.subr.mxu0 %v1457
    %1788 = vmatpush2.msra.mxu0 %v1456
    %1789 = vmatprep.subr.mxu0 %v1455
    %1790 = vmatpush2.msra.mxu0 %v1454
    %1791 = vmatprep.subr.mxu0 %v1453
    %1792 = vmatpush2.msra.mxu0 %v1452
    %1793 = vmatprep.subr.mxu0 %v1451
    %1794 = vmatpush2.msra.mxu0 %v1450
    %1795 = vmatprep.subr.mxu0 %v1449
    %1796 = vmatpush2.msra.mxu0 %v1448
    %1797 = vmatprep.subr.mxu0 %v1447
    %1798 = vmatpush2.msra.mxu0 %v1446
    %1799 = vmatprep.subr.mxu0 %v1445
    %1800 = vmatpush2.msra.mxu0 %v1444
    %1801 = vmatprep.subr.mxu0 %v1443
    %1802 = vmatpush2.msra.mxu0 %v1442
    %1803 = vmatprep.subr.mxu0 %v1441
    %1804 = vmatpush2.msra.mxu0 %v1440
    %1805 = vmatprep.subr.mxu0 %v1439
    %1806 = vmatpush2.msra.mxu0 %v1438
    %1807 = vmatprep.subr.mxu0 %v1437
    %1808 = vmatpush2.msra.mxu0 %v1436
    %1809 = vmatprep.subr.mxu0 %v1435
    %1810 = vmatpush2.msra.mxu0 %v1434
    %1811 = vmatprep.subr.mxu0 %v1433
    %1812 = vmatpush2.msra.mxu0 %v1432
    %1813 = vmatprep.subr.mxu0 %v1431
    %1814 = vmatpush2.msra.mxu0 %v1430
    %1815 = vmatprep.mubr.f32.mxu0 %v1203
    %1816 = vmatmul.mubr.f32.gmra.mxu0 %v1202
    %v1817 = vpop.f32.mrf.mxu0
    %v1818 = vadd.f32 %v1747, %v1817
    %v1819 = vpop.f32.mrf.mxu0
    %v1820 = vadd.f32 %v1749, %v1819
    %1821 = vdwg.mxu0
    %1822 = vmatprep.subr.mxu0 %v1493
    %1823 = vmatpush1.msra.mxu0 %v1492
    %1824 = vmatprep.subr.mxu0 %v1491
    %1825 = vmatpush1.msra.mxu0 %v1490
    %1826 = vmatprep.subr.mxu0 %v1489
    %1827 = vmatpush1.msra.mxu0 %v1488
    %1828 = vmatprep.subr.mxu0 %v1487
    %1829 = vmatpush1.msra.mxu0 %v1486
    %1830 = vmatprep.subr.mxu0 %v1485
    %1831 = vmatpush1.msra.mxu0 %v1484
    %1832 = vmatprep.subr.mxu0 %v1483
    %1833 = vmatpush1.msra.mxu0 %v1482
    %1834 = vmatprep.subr.mxu0 %v1481
    %1835 = vmatpush1.msra.mxu0 %v1480
    %1836 = vmatprep.subr.mxu0 %v1479
    %1837 = vmatpush1.msra.mxu0 %v1478
    %1838 = vmatprep.subr.mxu0 %v1477
    %1839 = vmatpush1.msra.mxu0 %v1476
    %1840 = vmatprep.subr.mxu0 %v1475
    %1841 = vmatpush1.msra.mxu0 %v1474
    %1842 = vmatprep.subr.mxu0 %v1473
    %1843 = vmatpush1.msra.mxu0 %v1472
    %1844 = vmatprep.subr.mxu0 %v1471
    %1845 = vmatpush1.msra.mxu0 %v1470
    %1846 = vmatprep.subr.mxu0 %v1469
    %1847 = vmatpush1.msra.mxu0 %v1468
    %1848 = vmatprep.subr.mxu0 %v1467
    %1849 = vmatpush1.msra.mxu0 %v1466
    %1850 = vmatprep.subr.mxu0 %v1465
    %1851 = vmatpush1.msra.mxu0 %v1464
    %1852 = vmatprep.subr.mxu0 %v1463
    %1853 = vmatpush1.msra.mxu0 %v1462
    %1854 = vmatprep.subr.mxu0 %v1525
    %1855 = vmatpush2.msra.mxu0 %v1524
    %1856 = vmatprep.subr.mxu0 %v1523
    %1857 = vmatpush2.msra.mxu0 %v1522
    %1858 = vmatprep.subr.mxu0 %v1521
    %1859 = vmatpush2.msra.mxu0 %v1520
    %1860 = vmatprep.subr.mxu0 %v1519
    %1861 = vmatpush2.msra.mxu0 %v1518
    %1862 = vmatprep.subr.mxu0 %v1517
    %1863 = vmatpush2.msra.mxu0 %v1516
    %1864 = vmatprep.subr.mxu0 %v1515
    %1865 = vmatpush2.msra.mxu0 %v1514
    %1866 = vmatprep.subr.mxu0 %v1513
    %1867 = vmatpush2.msra.mxu0 %v1512
    %1868 = vmatprep.subr.mxu0 %v1511
    %1869 = vmatpush2.msra.mxu0 %v1510
    %1870 = vmatprep.subr.mxu0 %v1509
    %1871 = vmatpush2.msra.mxu0 %v1508
    %1872 = vmatprep.subr.mxu0 %v1507
    %1873 = vmatpush2.msra.mxu0 %v1506
    %1874 = vmatprep.subr.mxu0 %v1505
    %1875 = vmatpush2.msra.mxu0 %v1504
    %1876 = vmatprep.subr.mxu0 %v1503
    %1877 = vmatpush2.msra.mxu0 %v1502
    %1878 = vmatprep.subr.mxu0 %v1501
    %1879 = vmatpush2.msra.mxu0 %v1500
    %1880 = vmatprep.subr.mxu0 %v1499
    %1881 = vmatpush2.msra.mxu0 %v1498
    %1882 = vmatprep.subr.mxu0 %v1497
    %1883 = vmatpush2.msra.mxu0 %v1496
    %1884 = vmatprep.subr.mxu0 %v1495
    %1885 = vmatpush2.msra.mxu0 %v1494
    %1886 = vmatprep.mubr.f32.mxu0 %v1205
    %1887 = vmatmul.mubr.f32.gmra.mxu0 %v1204
    %v1888 = vpop.f32.mrf.mxu0
    %v1889 = vadd.f32 %v1818, %v1888
    %v1890 = vpop.f32.mrf.mxu0
    %v1891 = vadd.f32 %v1820, %v1890
    %1892 = vdwg.mxu0
    %1893 = vst [vmem:[#allocation14] sm:$0xff] %v1889
    %1894 = vst [vmem:[#allocation14 + $0x8] sm:$0xff] %v1891
    // Predicated region
    $region58: #{tpu_custom_call.1} parent=1 // pred_check
      _
    $region59: #{tpu_custom_call.1} parent=1 // pred_check_branch
      %1896 = sbr.rel (0) target = $region61
    $region60: #{tpu_custom_call.1} parent=1 // pred_region
      %s1898 = ssub.s32 256, 256
      %1899 = vsyncadd [#allocation5], %s1898
      %s1901 = sshll.u32 [#allocation14], 4
      %s1902 = int_to_ptr.vmem [resolvable:$true] %s1901
      %1904 = dma.vmem_to_hbm [thread:$0]  %s1902, 256, %s7, [#allocation5]
    $region61: #{tpu_custom_call.1} parent=1 // pred_fallthru
      _
    // Predicated region
    $region62: #{tpu_custom_call.1} parent=1 // pred_check
      _
    $region63: #{tpu_custom_call.1} parent=1 // pred_check_branch
      %1906 = sbr.rel (0) target = $region65
    $region64: #{tpu_custom_call.1} parent=1 // pred_region
      %1907 = dma.done [#allocation5], 256
    $region65: #{tpu_custom_call.1} parent=1 // pred_fallthru
      _
    %1908 = vsyncpa [#allocation4], 1
    %1909 = vsyncpa [#allocation7], 1
    %1910 = vsyncpa [#allocation10], 1
    %1911 = vsyncpa [#allocation13], 1
    %1912 = vsyncpa [#allocation5], 1

</llo_original>
